<compile_context>
chip_gen: v6e
topology: v6e:2x2x1
jax: 0.10.0
libtpu: 0.0.40
codegen_flags: <defaults>
</compile_context>

<pallas_src>
import functools

import jax
import jax.numpy as jnp
from jax.experimental import pallas as pl
from jax.experimental.pallas import tpu as pltpu


# ----------------------------- shared gating math -----------------------------

def _gate_scales(s, fcwT, fcb, w01, b01):
    """Per-channel 2-branch softmax weights from per-channel means.

    s    : (C, 1)  f32 per-channel mean of U = x_conv + x_mamba
    fcwT : (C, d)  fc.weight^T
    fcb  : (1, d)  fc.bias
    w01  : (C, 2d) [fcs0.weight | fcs1.weight]
    b01  : (C, 2)  [fcs0.bias   , fcs1.bias]
    Returns (s0, s1), each (C, 1).
    """
    d = fcb.shape[-1]
    # Z = fc(S): degenerate M=1 matmul -> broadcast-multiply + sublane reduce.
    z = jnp.sum(fcwT * s, axis=0, keepdims=True) + fcb                    # (1, d)
    a0 = jnp.sum(w01[:, :d] * z, axis=-1, keepdims=True) + b01[:, 0:1]    # (C, 1)
    a1 = jnp.sum(w01[:, d:] * z, axis=-1, keepdims=True) + b01[:, 1:2]    # (C, 1)
    m = jnp.maximum(a0, a1)
    e0 = jnp.exp(a0 - m)
    e1 = jnp.exp(a1 - m)
    inv = 1.0 / (e0 + e1)
    return e0 * inv, e1 * inv


# ------------------------------ fused single pass ------------------------------

def _sk_fused_kernel(xc_ref, xm_ref, fcwT_ref, fcb_ref, w01_ref, b01_ref, o_ref):
    """One batch element per grid step; blocks are (1, C, N), N = H*W on lanes."""
    xc = xc_ref[0].astype(jnp.float32)                     # (C, N)
    xm = xm_ref[0].astype(jnp.float32)                     # (C, N)
    _, n = xc.shape
    # Per-channel mean of U = xc + xm without materializing U.
    s = (jnp.sum(xc, axis=-1, keepdims=True) +
         jnp.sum(xm, axis=-1, keepdims=True)) * jnp.float32(1.0 / n)      # (C, 1)
    s0, s1 = _gate_scales(s, fcwT_ref[...], fcb_ref[...],
                          w01_ref[...], b01_ref[...])
    o_ref[0] = (s0 * xc + s1 * xm).astype(o_ref.dtype)


# ---------------------- two-pass strip-tiled fallback kernels ------------------

def _sk_pool_gate_kernel(total_n, ragged,
                         xc_ref, xm_ref, fcwT_ref, fcb_ref, w01_ref, b01_ref,
                         scales_ref, sum_sc):
    """Pass A: accumulate per-channel sums over spatial strips, gate at the end."""
    strip = pl.program_id(1)
    n_strips = pl.num_programs(1)

    @pl.when(strip == 0)
    def _init():
        sum_sc[...] = jnp.zeros_like(sum_sc)

    xc = xc_ref[0].astype(jnp.float32)                     # (C, tn)
    xm = xm_ref[0].astype(jnp.float32)
    if ragged:
        c, tn = xc.shape
        col = jax.lax.broadcasted_iota(jnp.int32, (c, tn), 1) + strip * tn
        valid = col < total_n
        xc = jnp.where(valid, xc, 0.0)
        xm = jnp.where(valid, xm, 0.0)
    sum_sc[...] += (jnp.sum(xc, axis=-1, keepdims=True) +
                    jnp.sum(xm, axis=-1, keepdims=True))

    @pl.when(strip == n_strips - 1)
    def _finalize():
        s = sum_sc[...] * jnp.float32(1.0 / total_n)       # (C, 1)
        s0, s1 = _gate_scales(s, fcwT_ref[...], fcb_ref[...],
                              w01_ref[...], b01_ref[...])
        scales_ref[0] = jnp.concatenate([s0, s1], axis=-1)  # (C, 2)


def _sk_scale_kernel(xc_ref, xm_ref, scales_ref, o_ref):
    """Pass B: elementwise V = s0*xc + s1*xm over one spatial strip."""
    xc = xc_ref[0].astype(jnp.float32)
    xm = xm_ref[0].astype(jnp.float32)
    sc = scales_ref[0].astype(jnp.float32)                 # (C, 2)
    s0 = sc[:, 0:1]
    s1 = sc[:, 1:2]
    o_ref[0] = (s0 * xc + s1 * xm).astype(o_ref.dtype)


# ----------------------------------- wrapper -----------------------------------

def sk_attention_forward(x_conv, x_mamba, params, *,
                         vmem_budget_bytes=48 * 1024 * 1024,
                         strip_lanes=8192,
                         force_tiled=False):
    """x_conv, x_mamba: (B, C, H, W), same dtype (f32 or bf16). Returns same."""
    assert x_conv.shape == x_mamba.shape
    assert x_conv.dtype == x_mamba.dtype
    B, C, H, W = x_conv.shape
    N = H * W
    io_dtype = x_conv.dtype
    io_itemsize = jnp.dtype(io_dtype).itemsize

    fc_w = params['fc_w']            # (d, C)  PyTorch nn.Linear layout
    fc_b = params['fc_b']            # (d,)
    d = fc_w.shape[0]

    # Tiny packed weight operands (resident in VMEM via constant index_maps).
    fcwT = fc_w.T.astype(jnp.float32)                                      # (C, d)
    fcb = fc_b.reshape(1, d).astype(jnp.float32)                           # (1, d)
    w01 = jnp.concatenate([params['fcs0_w'], params['fcs1_w']],
                          axis=1).astype(jnp.float32)                      # (C, 2d)
    b01 = jnp.stack([params['fcs0_b'], params['fcs1_b']],
                    axis=1).astype(jnp.float32)                            # (C, 2)

    # Free reshapes (no relayout): channels on sublanes, H*W on lanes.
    xc = x_conv.reshape(B, C, N)
    xm = x_mamba.reshape(B, C, N)

    weight_bytes = 4 * (C * d + d + 2 * C * d + 2 * C)
    # Double-buffered (xc, xm, out) per-batch blocks + weights + slack.
    fused_need = 2 * 3 * C * N * io_itemsize + 2 * weight_bytes + (1 << 20)
    use_fused = (not force_tiled) and (fused_need <= vmem_budget_bytes)

    if use_fused:
        # NOTE(v7x): grid has only B programs; with B == 1 one TensorCore idles.
        # For that regime, lower vmem_budget_bytes / force_tiled to get
        # B * n_strips parallel programs in pass B instead.
        batch_spec = pl.BlockSpec((1, C, N), lambda b: (b, 0, 0))

        def wspec(shape):
            nd = len(shape)
            return pl.BlockSpec(shape, lambda b, _nd=nd: (0,) * _nd)

        out = pl.pallas_call(
            _sk_fused_kernel,
            out_shape=jax.ShapeDtypeStruct((B, C, N), io_dtype),
            grid=(B,),
            in_specs=[batch_spec, batch_spec,
                      wspec((C, d)), wspec((1, d)),
                      wspec((C, 2 * d)), wspec((C, 2))],
            out_specs=batch_spec,
            compiler_params=pltpu.CompilerParams(
                dimension_semantics=("parallel",),
                vmem_limit_bytes=int(vmem_budget_bytes)),
        )(xc, xm, fcwT, fcb, w01, b01)
        return out.reshape(B, C, H, W)

    # -------------------- two-pass strip-tiled fallback --------------------
    # Strip length: multiple of 128 lanes, sized so double-buffered
    # (xc, xm, out) strips use at most ~3/4 of the VMEM budget.
    max_tn = (vmem_budget_bytes * 3 // 4) // (6 * C * io_itemsize)
    max_tn = max(128, (max_tn // 128) * 128)
    strip_lanes = max(128, (strip_lanes // 128) * 128)
    tn = min(strip_lanes, max_tn)
    if N <= tn:
        tn = N
    n_strips = (N + tn - 1) // tn
    ragged = (N % tn) != 0

    strip_spec = pl.BlockSpec((1, C, tn), lambda b, s: (b, 0, s))
    scales_spec = pl.BlockSpec((1, C, 2), lambda b, s: (b, 0, 0))

    def wspec2(shape):
        nd = len(shape)
        return pl.BlockSpec(shape, lambda b, s, _nd=nd: (0,) * _nd)

    # Pass A: per-channel pooled mean + softmax gate -> (B, C, 2) scales.
    scales = pl.pallas_call(
        functools.partial(_sk_pool_gate_kernel, N, ragged),
        out_shape=jax.ShapeDtypeStruct((B, C, 2), jnp.float32),
        grid=(B, n_strips),
        in_specs=[strip_spec, strip_spec,
                  wspec2((C, d)), wspec2((1, d)),
                  wspec2((C, 2 * d)), wspec2((C, 2))],
        out_specs=scales_spec,
        scratch_shapes=[pltpu.VMEM((C, 1), jnp.float32)],
        compiler_params=pltpu.CompilerParams(
            dimension_semantics=("parallel", "arbitrary"),
            vmem_limit_bytes=int(vmem_budget_bytes)),
    )(xc, xm, fcwT, fcb, w01, b01)

    # Pass B: elementwise recombination, fully parallel grid (B * n_strips).
    out = pl.pallas_call(
        _sk_scale_kernel,
        out_shape=jax.ShapeDtypeStruct((B, C, N), io_dtype),
        grid=(B, n_strips),
        in_specs=[strip_spec, strip_spec, scales_spec],
        out_specs=strip_spec,
        compiler_params=pltpu.CompilerParams(
            dimension_semantics=("parallel", "parallel"),
            vmem_limit_bytes=int(vmem_budget_bytes)),
    )(xc, xm, scales)
    return out.reshape(B, C, H, W)


# ---------------------------------- reference ----------------------------------

def sk_attention_reference(x_conv, x_mamba, params):
    hp = jax.lax.Precision.HIGHEST
    U = x_conv + x_mamba
    S = U.mean(axis=(2, 3))                                            # (B, C)
    Z = jnp.dot(S, params['fc_w'].T, precision=hp) + params['fc_b']    # (B, d)
    a0 = jnp.dot(Z, params['fcs0_w'].T, precision=hp) + params['fcs0_b']
    a1 = jnp.dot(Z, params['fcs1_w'].T, precision=hp) + params['fcs1_b']
    w = jax.nn.softmax(jnp.stack([a0, a1], axis=0), axis=0)            # (2, B, C)
    s0 = w[0][:, :, None, None]
    s1 = w[1][:, :, None, None]
    return s0 * x_conv + s1 * x_mamba


# ----------------------------------- params ------------------------------------

def init_params(key, channel, reduction=16, L=32):
    d = max(L, channel // reduction)
    ks = jax.random.split(key, 6)

    def nrm(k, shape, scale=0.1):
        return scale * jax.random.normal(k, shape, jnp.float32)

    return {
        'fc_w':   nrm(ks[0], (d, channel)),
        'fc_b':   nrm(ks[1], (d,)),
        'fcs0_w': nrm(ks[2], (channel, d)),
        'fcs0_b': nrm(ks[3], (channel,)),
        'fcs1_w': nrm(ks[4], (channel, d)),
        'fcs1_b': nrm(ks[5], (channel,)),
    }


# ------------------------------------ main --------------------------------------

if __name__ == "__main__":
    key = jax.random.PRNGKey(0)
    k1, k2, kp, k3, k4, kp2 = jax.random.split(key, 6)

    fwd = jax.jit(sk_attention_forward,
                  static_argnames=("vmem_budget_bytes", "strip_lanes",
                                   "force_tiled"))

    # --- Case 1: fused path, f32 I/O -------------------------------------------
    B, C, H, W = 2, 128, 16, 16           # H*W = 256 -> lane-dense stores
    x_conv = jax.random.normal(k1, (B, C, H, W), jnp.float32)
    x_mamba = jax.random.normal(k2, (B, C, H, W), jnp.float32)
    params = init_params(kp, C, reduction=16, L=32)   # d = max(32, 8) = 32

    out = jax.block_until_ready(fwd(x_conv, x_mamba, params))
    assert out.shape == (B, C, H, W) and out.dtype == jnp.float32
    assert bool(jnp.all(jnp.isfinite(out)))
    ref = sk_attention_reference(x_conv, x_mamba, params)
    err = float(jnp.max(jnp.abs(out - ref)))
    assert err < 1e-3, f"fused f32 max abs err {err}"

    # --- Case 2: fused path, bf16 I/O (halved HBM traffic) ----------------------
    xc16 = x_conv.astype(jnp.bfloat16)
    xm16 = x_mamba.astype(jnp.bfloat16)
    out16 = jax.block_until_ready(fwd(xc16, xm16, params))
    assert out16.dtype == jnp.bfloat16
    ref16 = sk_attention_reference(xc16.astype(jnp.float32),
                                   xm16.astype(jnp.float32), params)
    err16 = float(jnp.max(jnp.abs(out16.astype(jnp.float32) - ref16)))
    assert err16 < 3e-2, f"fused bf16 max abs err {err16}"

    # --- Case 3: forced two-pass tiled path with a ragged last strip ------------
    B2, C2, H2, W2 = 2, 64, 20, 20        # N = 400 -> strips of 128, ragged tail
    xc_b = jax.random.normal(k3, (B2, C2, H2, W2), jnp.float32)
    xm_b = jax.random.normal(k4, (B2, C2, H2, W2), jnp.float32)
    params2 = init_params(kp2, C2, reduction=16, L=32)
    out_t = jax.block_until_ready(
        fwd(xc_b, xm_b, params2, force_tiled=True, strip_lanes=128))
    assert out_t.shape == (B2, C2, H2, W2)
    ref_t = sk_attention_reference(xc_b, xm_b, params2)
    err_t = float(jnp.max(jnp.abs(out_t - ref_t)))
    assert err_t < 1e-3, f"tiled f32 max abs err {err_t}"

    print("KERNEL_OK")
</pallas_src>

<mosaic_0001>
module attributes {stable_mosaic.version = 11 : i64} {
  func.func @_sk_fused_kernel(%arg0: i32, %arg1: memref<1x128x256xf32, #tpu.memory_space<vmem>>, %arg2: memref<1x128x256xf32, #tpu.memory_space<vmem>>, %arg3: memref<128x32xf32, #tpu.memory_space<vmem>>, %arg4: memref<1x32xf32, #tpu.memory_space<vmem>>, %arg5: memref<128x64xf32, #tpu.memory_space<vmem>>, %arg6: memref<128x2xf32, #tpu.memory_space<vmem>>, %arg7: memref<1x128x256xf32, #tpu.memory_space<vmem>>) attributes {dimension_semantics = [#tpu.dimension_semantics<parallel>], iteration_bounds = array<i64: 2>, scalar_prefetch = 0 : i64, scratch_operands = 0 : i64, tpu.core_type = #tpu.core_type<tc>, window_params = [{transform_indices = @transform_0, window_bounds = array<i64: 1, 128, 256>}, {transform_indices = @transform_1, window_bounds = array<i64: 1, 128, 256>}, {pipeline_mode = #tpu.pipeline_mode<synchronous>, transform_indices = @transform_2, window_bounds = array<i64: 128, 32>}, {pipeline_mode = #tpu.pipeline_mode<synchronous>, transform_indices = @transform_3, window_bounds = array<i64: 1, 32>}, {pipeline_mode = #tpu.pipeline_mode<synchronous>, transform_indices = @transform_4, window_bounds = array<i64: 128, 64>}, {pipeline_mode = #tpu.pipeline_mode<synchronous>, transform_indices = @transform_5, window_bounds = array<i64: 128, 2>}, {transform_indices = @transform_6, window_bounds = array<i64: 1, 128, 256>}]} {
    %c0 = arith.constant 0 : index
    %c0_0 = arith.constant 0 : index
    %c0_1 = arith.constant 0 : index
    %0 = vector.load %arg1[%c0, %c0_0, %c0_1] : memref<1x128x256xf32, #tpu.memory_space<vmem>>, vector<1x128x256xf32>
    %1 = vector.shape_cast %0 : vector<1x128x256xf32> to vector<128x256xf32>
    %c0_2 = arith.constant 0 : index
    %c0_3 = arith.constant 0 : index
    %c0_4 = arith.constant 0 : index
    %2 = vector.load %arg2[%c0_2, %c0_3, %c0_4] : memref<1x128x256xf32, #tpu.memory_space<vmem>>, vector<1x128x256xf32>
    %3 = vector.shape_cast %2 : vector<1x128x256xf32> to vector<128x256xf32>
    %cst = arith.constant dense<0.000000e+00> : vector<128xf32>
    %4 = vector.multi_reduction <add>, %1, %cst [1] : vector<128x256xf32> to vector<128xf32>
    %5 = vector.shape_cast %4 : vector<128xf32> to vector<128x1xf32>
    %cst_5 = arith.constant dense<0.000000e+00> : vector<128xf32>
    %6 = vector.multi_reduction <add>, %3, %cst_5 [1] : vector<128x256xf32> to vector<128xf32>
    %7 = vector.shape_cast %6 : vector<128xf32> to vector<128x1xf32>
    %8 = arith.addf %5, %7 : vector<128x1xf32>
    %cst_6 = arith.constant 3.906250e-03 : f32
    %9 = vector.broadcast %cst_6 : f32 to vector<128x1xf32>
    %10 = arith.mulf %8, %9 : vector<128x1xf32>
    %c0_7 = arith.constant 0 : index
    %c0_8 = arith.constant 0 : index
    %11 = vector.load %arg3[%c0_7, %c0_8] : memref<128x32xf32, #tpu.memory_space<vmem>>, vector<128x32xf32>
    %c0_9 = arith.constant 0 : index
    %c0_10 = arith.constant 0 : index
    %12 = vector.load %arg4[%c0_9, %c0_10] : memref<1x32xf32, #tpu.memory_space<vmem>>, vector<1x32xf32>
    %c0_11 = arith.constant 0 : index
    %c0_12 = arith.constant 0 : index
    %13 = vector.load %arg5[%c0_11, %c0_12] : memref<128x64xf32, #tpu.memory_space<vmem>>, vector<128x64xf32>
    %c0_13 = arith.constant 0 : index
    %c0_14 = arith.constant 0 : index
    %14 = vector.load %arg6[%c0_13, %c0_14] : memref<128x2xf32, #tpu.memory_space<vmem>>, vector<128x2xf32>
    %15 = vector.broadcast %10 : vector<128x1xf32> to vector<128x32xf32>
    %16 = arith.mulf %11, %15 : vector<128x32xf32>
    %cst_15 = arith.constant dense<0.000000e+00> : vector<32xf32>
    %17 = vector.multi_reduction <add>, %16, %cst_15 [0] : vector<128x32xf32> to vector<32xf32>
    %18 = vector.shape_cast %17 : vector<32xf32> to vector<1x32xf32>
    %19 = arith.addf %18, %12 : vector<1x32xf32>
    %20 = vector.extract_strided_slice %13 {offsets = [0, 0], sizes = [128, 32], strides = [1, 1]} : vector<128x64xf32> to vector<128x32xf32>
    %21 = vector.broadcast %19 : vector<1x32xf32> to vector<128x32xf32>
    %22 = arith.mulf %20, %21 : vector<128x32xf32>
    %cst_16 = arith.constant dense<0.000000e+00> : vector<128xf32>
    %23 = vector.multi_reduction <add>, %22, %cst_16 [1] : vector<128x32xf32> to vector<128xf32>
    %24 = vector.shape_cast %23 : vector<128xf32> to vector<128x1xf32>
    %25 = vector.extract_strided_slice %14 {offsets = [0, 0], sizes = [128, 1], strides = [1, 1]} : vector<128x2xf32> to vector<128x1xf32>
    %26 = arith.addf %24, %25 : vector<128x1xf32>
    %27 = vector.extract_strided_slice %13 {offsets = [0, 32], sizes = [128, 32], strides = [1, 1]} : vector<128x64xf32> to vector<128x32xf32>
    %28 = vector.broadcast %19 : vector<1x32xf32> to vector<128x32xf32>
    %29 = arith.mulf %27, %28 : vector<128x32xf32>
    %cst_17 = arith.constant dense<0.000000e+00> : vector<128xf32>
    %30 = vector.multi_reduction <add>, %29, %cst_17 [1] : vector<128x32xf32> to vector<128xf32>
    %31 = vector.shape_cast %30 : vector<128xf32> to vector<128x1xf32>
    %32 = vector.extract_strided_slice %14 {offsets = [0, 1], sizes = [128, 1], strides = [1, 1]} : vector<128x2xf32> to vector<128x1xf32>
    %33 = arith.addf %31, %32 : vector<128x1xf32>
    %34 = arith.maximumf %26, %33 : vector<128x1xf32>
    %35 = arith.subf %26, %34 : vector<128x1xf32>
    %36 = math.exp %35 : vector<128x1xf32>
    %37 = arith.subf %33, %34 : vector<128x1xf32>
    %38 = math.exp %37 : vector<128x1xf32>
    %39 = arith.addf %36, %38 : vector<128x1xf32>
    %cst_18 = arith.constant 1.000000e+00 : f32
    %40 = vector.broadcast %cst_18 : f32 to vector<128x1xf32>
    %41 = arith.divf %40, %39 : vector<128x1xf32>
    %42 = arith.mulf %36, %41 : vector<128x1xf32>
    %43 = arith.mulf %38, %41 : vector<128x1xf32>
    %44 = vector.broadcast %42 : vector<128x1xf32> to vector<128x256xf32>
    %45 = arith.mulf %44, %1 : vector<128x256xf32>
    %46 = vector.broadcast %43 : vector<128x1xf32> to vector<128x256xf32>
    %47 = arith.mulf %46, %3 : vector<128x256xf32>
    %48 = arith.addf %45, %47 : vector<128x256xf32>
    %c0_19 = arith.constant 0 : index
    %c0_20 = arith.constant 0 : index
    %c0_21 = arith.constant 0 : index
    %49 = vector.load %arg7[%c0_19, %c0_20, %c0_21] : memref<1x128x256xf32, #tpu.memory_space<vmem>>, vector<1x128x256xf32>
    %50 = vector.shape_cast %49 : vector<1x128x256xf32> to vector<128x256xf32>
    %51 = vector.shape_cast %48 : vector<128x256xf32> to vector<1x128x256xf32>
    tpu.vector_store %arg7[%c0_19, %c0_20, %c0_21], %51 {strides = array<i32>} : memref<1x128x256xf32, #tpu.memory_space<vmem>>, vector<1x128x256xf32>,
    return
  }
  func.func @transform_0(%arg0: i32) -> (i32, i32, i32) {
    %c0_i32 = arith.constant 0 : i32
    %c0_i32_0 = arith.constant 0 : i32
    %c0_i32_1 = arith.constant 0 : i32
    return %arg0, %c0_i32, %c0_i32_0 : i32, i32, i32
  }
  func.func @transform_1(%arg0: i32) -> (i32, i32, i32) {
    %c0_i32 = arith.constant 0 : i32
    %c0_i32_0 = arith.constant 0 : i32
    %c0_i32_1 = arith.constant 0 : i32
    return %arg0, %c0_i32, %c0_i32_0 : i32, i32, i32
  }
  func.func @transform_2(%arg0: i32) -> (i32, i32) {
    %c0_i32 = arith.constant 0 : i32
    %c0_i32_0 = arith.constant 0 : i32
    %c0_i32_1 = arith.constant 0 : i32
    return %c0_i32, %c0_i32_0 : i32, i32
  }
  func.func @transform_3(%arg0: i32) -> (i32, i32) {
    %c0_i32 = arith.constant 0 : i32
    %c0_i32_0 = arith.constant 0 : i32
    %c0_i32_1 = arith.constant 0 : i32
    return %c0_i32, %c0_i32_0 : i32, i32
  }
  func.func @transform_4(%arg0: i32) -> (i32, i32) {
    %c0_i32 = arith.constant 0 : i32
    %c0_i32_0 = arith.constant 0 : i32
    %c0_i32_1 = arith.constant 0 : i32
    return %c0_i32, %c0_i32_0 : i32, i32
  }
  func.func @transform_5(%arg0: i32) -> (i32, i32) {
    %c0_i32 = arith.constant 0 : i32
    %c0_i32_0 = arith.constant 0 : i32
    %c0_i32_1 = arith.constant 0 : i32
    return %c0_i32, %c0_i32_0 : i32, i32
  }
  func.func @transform_6(%arg0: i32) -> (i32, i32, i32) {
    %c0_i32 = arith.constant 0 : i32
    %c0_i32_0 = arith.constant 0 : i32
    %c0_i32_1 = arith.constant 0 : i32
    return %arg0, %c0_i32, %c0_i32_0 : i32, i32, i32
  }
}

</mosaic_0001>

<llo_original>
// kernel: sk_attention_forward.1
$region0: #{sk_attention_forward.1}
  #allocation0 [shape = 'u32[]', space=smem, size = 0x4, offset = 0x4, fixed_abs, tag = 'smem constant byte address 0x4 - core index']
  #allocation1 [shape = 'u32[144,128]{1,0:T(1,128)}', space=vmem, size = 0x12000, scoped, tag = 'internal scratch']
  %s0 = inlined_call_operand.vmem [shape: f32[2,128,256], index: 0, kind: input, shape index: {}]
  %s1 = inlined_call_operand.vmem [shape: f32[2,128,256], index: 1, kind: input, shape index: {}]
  %s2 = inlined_call_operand.vmem [shape: f32[128,32], index: 2, kind: input, shape index: {}]
  %s3 = inlined_call_operand.vmem [shape: f32[1,32], index: 3, kind: input, shape index: {}]
  %s4 = inlined_call_operand.vmem [shape: f32[128,64], index: 4, kind: input, shape index: {}]
  %s5 = inlined_call_operand.vmem [shape: f32[128,2], index: 5, kind: input, shape index: {}]
  %s6 = inlined_call_operand.vmem [shape: f32[2,128,256], index: 6, kind: output, shape index: {}]
  %s7 = sld [smem:[#allocation0]]
  $region57: #{sk_attention_forward.1} parent=0
    _
  %s9 = ssub.s32 1, %s7
  %s10 = scalar_select 0, %s9, %s7
  loop: start=0, step=1, limit=4
  $region2: #{sk_attention_forward.1} parent=0 // loop_pre_header
    _
  $region3: #{sk_attention_forward.1} parent=0 // loop_header
    %s12 = sphi 0, %s16
    %p13 = scmp.ge.s32.totalorder %s12, 4
    %s22 = sphi 0, %s24
    %s25 = sphi 0, %s22
    %s26 = sphi 0, %s25
    %s42 = sphi 0, %s26
    %s48 = sphi 0, %s50
    %s51 = sphi 0, %s48
    %s52 = sphi 0, %s51
    %s68 = sphi 0, %s52
    %s72 = sphi 0, %s72
    %s74 = sphi 0, %s72
    %s75 = sphi 0, %s74
    %s89 = sphi 0, %s75
    %s93 = sphi 0, %s93
    %s95 = sphi 0, %s93
    %s96 = sphi 0, %s95
    %s110 = sphi 0, %s96
    %s114 = sphi 0, %s114
    %s116 = sphi 0, %s114
    %s117 = sphi 0, %s116
    %s131 = sphi 0, %s117
    %s135 = sphi 0, %s135
    %s137 = sphi 0, %s135
    %s138 = sphi 0, %s137
    %s152 = sphi 0, %s138
    %s158 = sphi 0, %s160
    %s161 = sphi 0, %s158
    %s162 = sphi 0, %s161
    %s178 = sphi 0, %s162
  $region4: #{sk_attention_forward.1} parent=0 // loop_header_branch
    %15 = sbr.rel (%p13) target = $region8
  $region5: #{sk_attention_forward.1} parent=0 // loop_body
    %s17 = ssub.s32 %s12, 1
    %s18 = ssub.s32 %s12, 2
    %s19 = sadd.s32 %s12, 1
    %s20 = ssub.s32 %s12, %s19
    %p21 = scmp.eq.s32.totalorder %s20, 0
    %s23 = sadd.s32 %s22, 1
    %s24 = scalar_select %p21, %s22, %s23
    %p27 = pneg %p21
    %p28 = scmp.eq.s32.totalorder %s12, 1
    %p29 = por %p27, %p28
    %p30 = scmp.ne.s32.totalorder %s22, %s25
    %p31 = scmp.eq.s32.totalorder %s12, 0
    %p32 = por %p30, %p31
    %p33 = scmp.ne.s32.totalorder %s22, %s25
    %p34 = scmp.eq.s32.totalorder %s17, 1
    %p35 = por %p33, %p34
    %p36 = scmp.ne.s32.totalorder %s25, %s26
    %p37 = scmp.eq.s32.totalorder %s17, 0
    %p38 = por %p36, %p37
    %p39 = scmp.ne.s32.totalorder %s25, %s26
    %p40 = scmp.eq.s32.totalorder %s18, 1
    %p41 = por %p39, %p40
    %p43 = scmp.ne.s32.totalorder %s26, %s42
    %p44 = scmp.eq.s32.totalorder %s18, 0
    %p45 = por %p43, %p44
    %s46 = ssub.s32 %s12, %s19
    %p47 = scmp.eq.s32.totalorder %s46, 0
    %s49 = sadd.s32 %s48, 1
    %s50 = scalar_select %p47, %s48, %s49
    %p53 = pneg %p47
    %p54 = scmp.eq.s32.totalorder %s12, 1
    %p55 = por %p53, %p54
    %p56 = scmp.ne.s32.totalorder %s48, %s51
    %p57 = scmp.eq.s32.totalorder %s12, 0
    %p58 = por %p56, %p57
    %p59 = scmp.ne.s32.totalorder %s48, %s51
    %p60 = scmp.eq.s32.totalorder %s17, 1
    %p61 = por %p59, %p60
    %p62 = scmp.ne.s32.totalorder %s51, %s52
    %p63 = scmp.eq.s32.totalorder %s17, 0
    %p64 = por %p62, %p63
    %p65 = scmp.ne.s32.totalorder %s51, %s52
    %p66 = scmp.eq.s32.totalorder %s18, 1
    %p67 = por %p65, %p66
    %p69 = scmp.ne.s32.totalorder %s52, %s68
    %p70 = scmp.eq.s32.totalorder %s18, 0
    %p71 = por %p69, %p70
    %s73 = sadd.s32 %s72, 1
    %p76 = scmp.eq.s32.totalorder %s12, 1
    %p77 = scmp.ne.s32.totalorder %s72, %s74
    %p78 = scmp.eq.s32.totalorder %s12, 0
    %p79 = por %p77, %p78
    %p80 = scmp.ne.s32.totalorder %s72, %s74
    %p81 = scmp.eq.s32.totalorder %s17, 1
    %p82 = por %p80, %p81
    %p83 = scmp.ne.s32.totalorder %s74, %s75
    %p84 = scmp.eq.s32.totalorder %s17, 0
    %p85 = por %p83, %p84
    %p86 = scmp.ne.s32.totalorder %s74, %s75
    %p87 = scmp.eq.s32.totalorder %s18, 1
    %p88 = por %p86, %p87
    %p90 = scmp.ne.s32.totalorder %s75, %s89
    %p91 = scmp.eq.s32.totalorder %s18, 0
    %p92 = por %p90, %p91
    %s94 = sadd.s32 %s93, 1
    %p97 = scmp.eq.s32.totalorder %s12, 1
    %p98 = scmp.ne.s32.totalorder %s93, %s95
    %p99 = scmp.eq.s32.totalorder %s12, 0
    %p100 = por %p98, %p99
    %p101 = scmp.ne.s32.totalorder %s93, %s95
    %p102 = scmp.eq.s32.totalorder %s17, 1
    %p103 = por %p101, %p102
    %p104 = scmp.ne.s32.totalorder %s95, %s96
    %p105 = scmp.eq.s32.totalorder %s17, 0
    %p106 = por %p104, %p105
    %p107 = scmp.ne.s32.totalorder %s95, %s96
    %p108 = scmp.eq.s32.totalorder %s18, 1
    %p109 = por %p107, %p108
    %p111 = scmp.ne.s32.totalorder %s96, %s110
    %p112 = scmp.eq.s32.totalorder %s18, 0
    %p113 = por %p111, %p112
    %s115 = sadd.s32 %s114, 1
    %p118 = scmp.eq.s32.totalorder %s12, 1
    %p119 = scmp.ne.s32.totalorder %s114, %s116
    %p120 = scmp.eq.s32.totalorder %s12, 0
    %p121 = por %p119, %p120
    %p122 = scmp.ne.s32.totalorder %s114, %s116
    %p123 = scmp.eq.s32.totalorder %s17, 1
    %p124 = por %p122, %p123
    %p125 = scmp.ne.s32.totalorder %s116, %s117
    %p126 = scmp.eq.s32.totalorder %s17, 0
    %p127 = por %p125, %p126
    %p128 = scmp.ne.s32.totalorder %s116, %s117
    %p129 = scmp.eq.s32.totalorder %s18, 1
    %p130 = por %p128, %p129
    %p132 = scmp.ne.s32.totalorder %s117, %s131
    %p133 = scmp.eq.s32.totalorder %s18, 0
    %p134 = por %p132, %p133
    %s136 = sadd.s32 %s135, 1
    %p139 = scmp.eq.s32.totalorder %s12, 1
    %p140 = scmp.ne.s32.totalorder %s135, %s137
    %p141 = scmp.eq.s32.totalorder %s12, 0
    %p142 = por %p140, %p141
    %p143 = scmp.ne.s32.totalorder %s135, %s137
    %p144 = scmp.eq.s32.totalorder %s17, 1
    %p145 = por %p143, %p144
    %p146 = scmp.ne.s32.totalorder %s137, %s138
    %p147 = scmp.eq.s32.totalorder %s17, 0
    %p148 = por %p146, %p147
    %p149 = scmp.ne.s32.totalorder %s137, %s138
    %p150 = scmp.eq.s32.totalorder %s18, 1
    %p151 = por %p149, %p150
    %p153 = scmp.ne.s32.totalorder %s138, %s152
    %p154 = scmp.eq.s32.totalorder %s18, 0
    %p155 = por %p153, %p154
    %s156 = ssub.s32 %s12, %s19
    %p157 = scmp.eq.s32.totalorder %s156, 0
    %s159 = sadd.s32 %s158, 1
    %s160 = scalar_select %p157, %s158, %s159
    %p163 = pneg %p157
    %p164 = scmp.eq.s32.totalorder %s12, 1
    %p165 = por %p163, %p164
    %p166 = scmp.ne.s32.totalorder %s158, %s161
    %p167 = scmp.eq.s32.totalorder %s12, 0
    %p168 = por %p166, %p167
    %p169 = scmp.ne.s32.totalorder %s158, %s161
    %p170 = scmp.eq.s32.totalorder %s17, 1
    %p171 = por %p169, %p170
    %p172 = scmp.ne.s32.totalorder %s161, %s162
    %p173 = scmp.eq.s32.totalorder %s17, 0
    %p174 = por %p172, %p173
    %p175 = scmp.ne.s32.totalorder %s161, %s162
    %p176 = scmp.eq.s32.totalorder %s18, 1
    %p177 = por %p175, %p176
    %p179 = scmp.ne.s32.totalorder %s162, %s178
    %p180 = scmp.eq.s32.totalorder %s18, 0
    %p181 = por %p179, %p180
    %p182 = scmp.le.s32.totalorder 1, %s12
    %p183 = scmp.lt.s32.totalorder %s12, 3
    %p184 = pnand %p182, %p183
    %p185 = pneg %p184
    // Predicated region
    $region9: #{sk_attention_forward.1} parent=5 // pred_check
      _
    $region10: #{sk_attention_forward.1} parent=5 // pred_check_branch
      %187 = sbr.rel (%p184) target = $region12
    $region11: #{sk_attention_forward.1} parent=5 // pred_region
      %s188 = ssub.s32 %s12, 1
      // Predicated region
      $region13: #{sk_attention_forward.1} parent=11 // pred_check
        %p189 = pneg %p85
      $region14: #{sk_attention_forward.1} parent=11 // pred_check_branch
        %191 = sbr.rel (%p189) target = $region16
      $region15: #{sk_attention_forward.1} parent=11 // pred_region
        _
      $region16: #{sk_attention_forward.1} parent=11 // pred_fallthru
        _
      // Predicated region
      $region17: #{sk_attention_forward.1} parent=11 // pred_check
        %p192 = pneg %p106
      $region18: #{sk_attention_forward.1} parent=11 // pred_check_branch
        %194 = sbr.rel (%p192) target = $region20
      $region19: #{sk_attention_forward.1} parent=11 // pred_region
        _
      $region20: #{sk_attention_forward.1} parent=11 // pred_fallthru
        _
      // Predicated region
      $region21: #{sk_attention_forward.1} parent=11 // pred_check
        %p195 = pneg %p127
      $region22: #{sk_attention_forward.1} parent=11 // pred_check_branch
        %197 = sbr.rel (%p195) target = $region24
      $region23: #{sk_attention_forward.1} parent=11 // pred_region
        _
      $region24: #{sk_attention_forward.1} parent=11 // pred_fallthru
        _
      // Predicated region
      $region25: #{sk_attention_forward.1} parent=11 // pred_check
        %p198 = pneg %p148
      $region26: #{sk_attention_forward.1} parent=11 // pred_check_branch
        %200 = sbr.rel (%p198) target = $region28
      $region27: #{sk_attention_forward.1} parent=11 // pred_region
        _
      $region28: #{sk_attention_forward.1} parent=11 // pred_fallthru
        _
    $region12: #{sk_attention_forward.1} parent=5 // pred_fallthru
      _
    %p201 = scmp.lt.s32.totalorder %s12, 2
    // Predicated region
    $region29: #{sk_attention_forward.1} parent=5 // pred_check
      %p202 = pneg %p201
    $region30: #{sk_attention_forward.1} parent=5 // pred_check_branch
      %204 = sbr.rel (%p202) target = $region32
    $region31: #{sk_attention_forward.1} parent=5 // pred_region
      // Predicated region
      $region33: #{sk_attention_forward.1} parent=31 // pred_check
        %p205 = pneg %p32
      $region34: #{sk_attention_forward.1} parent=31 // pred_check_branch
        %207 = sbr.rel (%p205) target = $region36
      $region35: #{sk_attention_forward.1} parent=31 // pred_region
        %p208 = scmp.lt.s32.totalorder %s12, 1
        %s209 = scalar_select %p208, %s12, 1
        %s210 = smul.addr %s209, 32
        %s211 = smul.addr %s210, 8
        %s212 = scalar_lea.vmem %s0, %s211
      $region36: #{sk_attention_forward.1} parent=31 // pred_fallthru
        _
      // Predicated region
      $region37: #{sk_attention_forward.1} parent=31 // pred_check
        %p213 = pneg %p58
      $region38: #{sk_attention_forward.1} parent=31 // pred_check_branch
        %215 = sbr.rel (%p213) target = $region40
      $region39: #{sk_attention_forward.1} parent=31 // pred_region
        %p216 = scmp.lt.s32.totalorder %s12, 1
        %s217 = scalar_select %p216, %s12, 1
        %s218 = smul.addr %s217, 32
        %s219 = smul.addr %s218, 8
        %s220 = scalar_lea.vmem %s1, %s219
      $region40: #{sk_attention_forward.1} parent=31 // pred_fallthru
        _
    $region32: #{sk_attention_forward.1} parent=5 // pred_fallthru
      _
    %p221 = scmp.le.s32.totalorder 1, %s12
    %p222 = scmp.lt.s32.totalorder %s12, 3
    %p223 = pnand %p221, %p222
    %p224 = pneg %p223
    // Predicated region
    $region41: #{sk_attention_forward.1} parent=5 // pred_check
      _
    $region42: #{sk_attention_forward.1} parent=5 // pred_check_branch
      %226 = sbr.rel (%p223) target = $region44
    $region43: #{sk_attention_forward.1} parent=5 // pred_region
      %s227 = ssub.s32 %s12, 1
      %p228 = scmp.lt.s32.totalorder %s17, 1
      %s229 = scalar_select %p228, %s17, 1
      %s230 = smul.addr %s229, 32
      %s231 = smul.addr %s230, 8
      %s232 = scalar_lea.vmem %s0, %s231
      %p233 = pneg %p38
      %p234 = pneg %p35
      %p235 = scmp.lt.s32.totalorder %s17, 1
      %s236 = scalar_select %p235, %s17, 1
      %s237 = smul.addr %s236, 32
      %s238 = smul.addr %s237, 8
      %s239 = scalar_lea.vmem %s1, %s238
      %p240 = pneg %p64
      %p241 = pneg %p61
      %p242 = pneg %p85
      %p243 = pneg %p82
      %p244 = pneg %p106
      %p245 = pneg %p103
      %p246 = pneg %p127
      %p247 = pneg %p124
      %p248 = pneg %p148
      %p249 = pneg %p145
      %p250 = pneg %p174
      %p251 = pneg %p171
      %p252 = scmp.lt.s32.totalorder %s17, 1
      %s253 = scalar_select %p252, %s17, 1
      %s254 = smul.addr %s253, 32
      %s255 = smul.addr %s254, 8
      %s256 = scalar_lea.vmem %s6, %s255
      %p257 = scmp.lt.s32.totalorder %s17, 1
      %s258 = scalar_select %p257, %s17, 1
      %s259 = smul.addr %s258, 32
      %s260 = smul.addr %s259, 8
      %s261 = scalar_lea.vmem %s0, %s260
      %p262 = scmp.lt.s32.totalorder %s17, 1
      %s263 = scalar_select %p262, %s17, 1
      %s264 = smul.addr %s263, 32
      %s265 = smul.addr %s264, 8
      %s266 = scalar_lea.vmem %s1, %s265
      %p267 = scmp.lt.s32.totalorder %s17, 1
      %s268 = scalar_select %p267, %s17, 1
      %s269 = smul.addr %s268, 32
      %s270 = smul.addr %s269, 8
      %s271 = scalar_lea.vmem %s6, %s270
      %v272 = vld [vmem:[%s261] sm:$0xff]
      %v273 = vld [vmem:[%s261 + $0x8] sm:$0xff]
      %v274 = vld [vmem:[%s261 + $0x10] sm:$0xff]
      %v275 = vld [vmem:[%s261 + $0x18] sm:$0xff]
      %v276 = vld [vmem:[%s261 + $0x20] sm:$0xff]
      %v277 = vld [vmem:[%s261 + $0x28] sm:$0xff]
      %v278 = vld [vmem:[%s261 + $0x30] sm:$0xff]
      %v279 = vld [vmem:[%s261 + $0x38] sm:$0xff]
      %v280 = vld [vmem:[%s261 + $0x40] sm:$0xff]
      %v281 = vld [vmem:[%s261 + $0x48] sm:$0xff]
      %v282 = vld [vmem:[%s261 + $0x50] sm:$0xff]
      %v283 = vld [vmem:[%s261 + $0x58] sm:$0xff]
      %v284 = vld [vmem:[%s261 + $0x60] sm:$0xff]
      %v285 = vld [vmem:[%s261 + $0x68] sm:$0xff]
      %v286 = vld [vmem:[%s261 + $0x70] sm:$0xff]
      %v287 = vld [vmem:[%s261 + $0x78] sm:$0xff]
      %v288 = vld [vmem:[%s261 + $0x80] sm:$0xff]
      %v289 = vld [vmem:[%s261 + $0x88] sm:$0xff]
      %v290 = vld [vmem:[%s261 + $0x90] sm:$0xff]
      %v291 = vld [vmem:[%s261 + $0x98] sm:$0xff]
      %v292 = vld [vmem:[%s261 + $0xa0] sm:$0xff]
      %v293 = vld [vmem:[%s261 + $0xa8] sm:$0xff]
      %v294 = vld [vmem:[%s261 + $0xb0] sm:$0xff]
      %v295 = vld [vmem:[%s261 + $0xb8] sm:$0xff]
      %v296 = vld [vmem:[%s261 + $0xc0] sm:$0xff]
      %v297 = vld [vmem:[%s261 + $0xc8] sm:$0xff]
      %v298 = vld [vmem:[%s261 + $0xd0] sm:$0xff]
      %v299 = vld [vmem:[%s261 + $0xd8] sm:$0xff]
      %v300 = vld [vmem:[%s261 + $0xe0] sm:$0xff]
      %v301 = vld [vmem:[%s261 + $0xe8] sm:$0xff]
      %v302 = vld [vmem:[%s261 + $0xf0] sm:$0xff]
      %v303 = vld [vmem:[%s261 + $0xf8] sm:$0xff]
      %v304 = vld [vmem:[%s266] sm:$0xff]
      %v305 = vld [vmem:[%s266 + $0x8] sm:$0xff]
      %v306 = vld [vmem:[%s266 + $0x10] sm:$0xff]
      %v307 = vld [vmem:[%s266 + $0x18] sm:$0xff]
      %v308 = vld [vmem:[%s266 + $0x20] sm:$0xff]
      %v309 = vld [vmem:[%s266 + $0x28] sm:$0xff]
      %v310 = vld [vmem:[%s266 + $0x30] sm:$0xff]
      %v311 = vld [vmem:[%s266 + $0x38] sm:$0xff]
      %v312 = vld [vmem:[%s266 + $0x40] sm:$0xff]
      %v313 = vld [vmem:[%s266 + $0x48] sm:$0xff]
      %v314 = vld [vmem:[%s266 + $0x50] sm:$0xff]
      %v315 = vld [vmem:[%s266 + $0x58] sm:$0xff]
      %v316 = vld [vmem:[%s266 + $0x60] sm:$0xff]
      %v317 = vld [vmem:[%s266 + $0x68] sm:$0xff]
      %v318 = vld [vmem:[%s266 + $0x70] sm:$0xff]
      %v319 = vld [vmem:[%s266 + $0x78] sm:$0xff]
      %v320 = vld [vmem:[%s266 + $0x80] sm:$0xff]
      %v321 = vld [vmem:[%s266 + $0x88] sm:$0xff]
      %v322 = vld [vmem:[%s266 + $0x90] sm:$0xff]
      %v323 = vld [vmem:[%s266 + $0x98] sm:$0xff]
      %v324 = vld [vmem:[%s266 + $0xa0] sm:$0xff]
      %v325 = vld [vmem:[%s266 + $0xa8] sm:$0xff]
      %v326 = vld [vmem:[%s266 + $0xb0] sm:$0xff]
      %v327 = vld [vmem:[%s266 + $0xb8] sm:$0xff]
      %v328 = vld [vmem:[%s266 + $0xc0] sm:$0xff]
      %v329 = vld [vmem:[%s266 + $0xc8] sm:$0xff]
      %v330 = vld [vmem:[%s266 + $0xd0] sm:$0xff]
      %v331 = vld [vmem:[%s266 + $0xd8] sm:$0xff]
      %v332 = vld [vmem:[%s266 + $0xe0] sm:$0xff]
      %v333 = vld [vmem:[%s266 + $0xe8] sm:$0xff]
      %v334 = vld [vmem:[%s266 + $0xf0] sm:$0xff]
      %v335 = vld [vmem:[%s266 + $0xf8] sm:$0xff]
      %v336 = vadd.f32 %v272, %v273
      %337 = vadd.xlane.f32.xlu0 %v336
      %v338 = vpop.xlane.xlu0 %337
      %v339 = vadd.f32 %v274, %v275
      %340 = vadd.xlane.f32.xlu0 %v339
      %v341 = vpop.xlane.xlu0 %340
      %v342 = vadd.f32 %v276, %v277
      %343 = vadd.xlane.f32.xlu0 %v342
      %v344 = vpop.xlane.xlu0 %343
      %v345 = vadd.f32 %v278, %v279
      %346 = vadd.xlane.f32.xlu0 %v345
      %v347 = vpop.xlane.xlu0 %346
      %v348 = vadd.f32 %v280, %v281
      %349 = vadd.xlane.f32.xlu0 %v348
      %v350 = vpop.xlane.xlu0 %349
      %v351 = vadd.f32 %v282, %v283
      %352 = vadd.xlane.f32.xlu0 %v351
      %v353 = vpop.xlane.xlu0 %352
      %v354 = vadd.f32 %v284, %v285
      %355 = vadd.xlane.f32.xlu0 %v354
      %v356 = vpop.xlane.xlu0 %355
      %v357 = vadd.f32 %v286, %v287
      %358 = vadd.xlane.f32.xlu0 %v357
      %v359 = vpop.xlane.xlu0 %358
      %v360 = vadd.f32 %v288, %v289
      %361 = vadd.xlane.f32.xlu0 %v360
      %v362 = vpop.xlane.xlu0 %361
      %v363 = vadd.f32 %v290, %v291
      %364 = vadd.xlane.f32.xlu0 %v363
      %v365 = vpop.xlane.xlu0 %364
      %v366 = vadd.f32 %v292, %v293
      %367 = vadd.xlane.f32.xlu0 %v366
      %v368 = vpop.xlane.xlu0 %367
      %v369 = vadd.f32 %v294, %v295
      %370 = vadd.xlane.f32.xlu0 %v369
      %v371 = vpop.xlane.xlu0 %370
      %v372 = vadd.f32 %v296, %v297
      %373 = vadd.xlane.f32.xlu0 %v372
      %v374 = vpop.xlane.xlu0 %373
      %v375 = vadd.f32 %v298, %v299
      %376 = vadd.xlane.f32.xlu0 %v375
      %v377 = vpop.xlane.xlu0 %376
      %v378 = vadd.f32 %v300, %v301
      %379 = vadd.xlane.f32.xlu0 %v378
      %v380 = vpop.xlane.xlu0 %379
      %v381 = vadd.f32 %v302, %v303
      %382 = vadd.xlane.f32.xlu0 %v381
      %v383 = vpop.xlane.xlu0 %382
      %v384 = vadd.f32 %v304, %v305
      %385 = vadd.xlane.f32.xlu0 %v384
      %v386 = vpop.xlane.xlu0 %385
      %v387 = vadd.f32 %v306, %v307
      %388 = vadd.xlane.f32.xlu0 %v387
      %v389 = vpop.xlane.xlu0 %388
      %v390 = vadd.f32 %v308, %v309
      %391 = vadd.xlane.f32.xlu0 %v390
      %v392 = vpop.xlane.xlu0 %391
      %v393 = vadd.f32 %v310, %v311
      %394 = vadd.xlane.f32.xlu0 %v393
      %v395 = vpop.xlane.xlu0 %394
      %v396 = vadd.f32 %v312, %v313
      %397 = vadd.xlane.f32.xlu0 %v396
      %v398 = vpop.xlane.xlu0 %397
      %v399 = vadd.f32 %v314, %v315
      %400 = vadd.xlane.f32.xlu0 %v399
      %v401 = vpop.xlane.xlu0 %400
      %v402 = vadd.f32 %v316, %v317
      %403 = vadd.xlane.f32.xlu0 %v402
      %v404 = vpop.xlane.xlu0 %403
      %v405 = vadd.f32 %v318, %v319
      %406 = vadd.xlane.f32.xlu0 %v405
      %v407 = vpop.xlane.xlu0 %406
      %v408 = vadd.f32 %v320, %v321
      %409 = vadd.xlane.f32.xlu0 %v408
      %v410 = vpop.xlane.xlu0 %409
      %v411 = vadd.f32 %v322, %v323
      %412 = vadd.xlane.f32.xlu0 %v411
      %v413 = vpop.xlane.xlu0 %412
      %v414 = vadd.f32 %v324, %v325
      %415 = vadd.xlane.f32.xlu0 %v414
      %v416 = vpop.xlane.xlu0 %415
      %v417 = vadd.f32 %v326, %v327
      %418 = vadd.xlane.f32.xlu0 %v417
      %v419 = vpop.xlane.xlu0 %418
      %v420 = vadd.f32 %v328, %v329
      %421 = vadd.xlane.f32.xlu0 %v420
      %v422 = vpop.xlane.xlu0 %421
      %v423 = vadd.f32 %v330, %v331
      %424 = vadd.xlane.f32.xlu0 %v423
      %v425 = vpop.xlane.xlu0 %424
      %v426 = vadd.f32 %v332, %v333
      %427 = vadd.xlane.f32.xlu0 %v426
      %v428 = vpop.xlane.xlu0 %427
      %v429 = vadd.f32 %v334, %v335
      %430 = vadd.xlane.f32.xlu0 %v429
      %v431 = vpop.xlane.xlu0 %430
      %v432 = vadd.f32 %v338, %v386
      %v433 = vadd.f32 %v341, %v389
      %v434 = vadd.f32 %v344, %v392
      %v435 = vadd.f32 %v347, %v395
      %v436 = vadd.f32 %v350, %v398
      %v437 = vadd.f32 %v353, %v401
      %v438 = vadd.f32 %v356, %v404
      %v439 = vadd.f32 %v359, %v407
      %v440 = vadd.f32 %v362, %v410
      %v441 = vadd.f32 %v365, %v413
      %v442 = vadd.f32 %v368, %v416
      %v443 = vadd.f32 %v371, %v419
      %v444 = vadd.f32 %v374, %v422
      %v445 = vadd.f32 %v377, %v425
      %v446 = vadd.f32 %v380, %v428
      %v447 = vadd.f32 %v383, %v431
      %v448 = vmul.f32 %v432, 0.00390625
      %v449 = vmul.f32 %v433, 0.00390625
      %v450 = vmul.f32 %v434, 0.00390625
      %v451 = vmul.f32 %v435, 0.00390625
      %v452 = vmul.f32 %v436, 0.00390625
      %v453 = vmul.f32 %v437, 0.00390625
      %v454 = vmul.f32 %v438, 0.00390625
      %v455 = vmul.f32 %v439, 0.00390625
      %v456 = vmul.f32 %v440, 0.00390625
      %v457 = vmul.f32 %v441, 0.00390625
      %v458 = vmul.f32 %v442, 0.00390625
      %v459 = vmul.f32 %v443, 0.00390625
      %v460 = vmul.f32 %v444, 0.00390625
      %v461 = vmul.f32 %v445, 0.00390625
      %v462 = vmul.f32 %v446, 0.00390625
      %v463 = vmul.f32 %v447, 0.00390625
      %v464 = vld [vmem:[%s2] sm:$0xff]
      %v465 = vld [vmem:[%s2 + $0x8] sm:$0xff]
      %v466 = vld [vmem:[%s2 + $0x10] sm:$0xff]
      %v467 = vld [vmem:[%s2 + $0x18] sm:$0xff]
      %v468 = vld [vmem:[%s2 + $0x20] sm:$0xff]
      %v469 = vld [vmem:[%s2 + $0x28] sm:$0xff]
      %v470 = vld [vmem:[%s2 + $0x30] sm:$0xff]
      %v471 = vld [vmem:[%s2 + $0x38] sm:$0xff]
      %v472 = vld [vmem:[%s2 + $0x40] sm:$0xff]
      %v473 = vld [vmem:[%s2 + $0x48] sm:$0xff]
      %v474 = vld [vmem:[%s2 + $0x50] sm:$0xff]
      %v475 = vld [vmem:[%s2 + $0x58] sm:$0xff]
      %v476 = vld [vmem:[%s2 + $0x60] sm:$0xff]
      %v477 = vld [vmem:[%s2 + $0x68] sm:$0xff]
      %v478 = vld [vmem:[%s2 + $0x70] sm:$0xff]
      %v479 = vld [vmem:[%s2 + $0x78] sm:$0xff]
      %v480 = vld [vmem:[%s3] sm:$0x1]
      %v481 = vld [vmem:[%s4] sm:$0xff]
      %v482 = vld [vmem:[%s4 + $0x8] sm:$0xff]
      %v483 = vld [vmem:[%s4 + $0x10] sm:$0xff]
      %v484 = vld [vmem:[%s4 + $0x18] sm:$0xff]
      %v485 = vld [vmem:[%s4 + $0x20] sm:$0xff]
      %v486 = vld [vmem:[%s4 + $0x28] sm:$0xff]
      %v487 = vld [vmem:[%s4 + $0x30] sm:$0xff]
      %v488 = vld [vmem:[%s4 + $0x38] sm:$0xff]
      %v489 = vld [vmem:[%s4 + $0x40] sm:$0xff]
      %v490 = vld [vmem:[%s4 + $0x48] sm:$0xff]
      %v491 = vld [vmem:[%s4 + $0x50] sm:$0xff]
      %v492 = vld [vmem:[%s4 + $0x58] sm:$0xff]
      %v493 = vld [vmem:[%s4 + $0x60] sm:$0xff]
      %v494 = vld [vmem:[%s4 + $0x68] sm:$0xff]
      %v495 = vld [vmem:[%s4 + $0x70] sm:$0xff]
      %v496 = vld [vmem:[%s4 + $0x78] sm:$0xff]
      %v497 = vld [vmem:[%s5] sm:$0xff]
      %v498 = vld [vmem:[%s5 + $0x8] sm:$0xff]
      %v499 = vld [vmem:[%s5 + $0x10] sm:$0xff]
      %v500 = vld [vmem:[%s5 + $0x18] sm:$0xff]
      %v501 = vld [vmem:[%s5 + $0x20] sm:$0xff]
      %v502 = vld [vmem:[%s5 + $0x28] sm:$0xff]
      %v503 = vld [vmem:[%s5 + $0x30] sm:$0xff]
      %v504 = vld [vmem:[%s5 + $0x38] sm:$0xff]
      %v505 = vld [vmem:[%s5 + $0x40] sm:$0xff]
      %v506 = vld [vmem:[%s5 + $0x48] sm:$0xff]
      %v507 = vld [vmem:[%s5 + $0x50] sm:$0xff]
      %v508 = vld [vmem:[%s5 + $0x58] sm:$0xff]
      %v509 = vld [vmem:[%s5 + $0x60] sm:$0xff]
      %v510 = vld [vmem:[%s5 + $0x68] sm:$0xff]
      %v511 = vld [vmem:[%s5 + $0x70] sm:$0xff]
      %v512 = vld [vmem:[%s5 + $0x78] sm:$0xff]
      %v513 = vmul.f32 %v464, %v448
      %v514 = vmul.f32 %v465, %v449
      %v515 = vmul.f32 %v466, %v450
      %v516 = vmul.f32 %v467, %v451
      %v517 = vmul.f32 %v468, %v452
      %v518 = vmul.f32 %v469, %v453
      %v519 = vmul.f32 %v470, %v454
      %v520 = vmul.f32 %v471, %v455
      %v521 = vmul.f32 %v472, %v456
      %v522 = vmul.f32 %v473, %v457
      %v523 = vmul.f32 %v474, %v458
      %v524 = vmul.f32 %v475, %v459
      %v525 = vmul.f32 %v476, %v460
      %v526 = vmul.f32 %v477, %v461
      %v527 = vmul.f32 %v478, %v462
      %v528 = vmul.f32 %v479, %v463
      %vm529 = vcmask 261120
      %v530 = vsel %vm529, %v513, 0.0
      %v531 = vsel %vm529, %v514, 0.0
      %v532 = vadd.f32 %v530, %v531
      %v533 = vsel %vm529, %v515, 0.0
      %v534 = vadd.f32 %v532, %v533
      %v535 = vsel %vm529, %v516, 0.0
      %v536 = vadd.f32 %v534, %v535
      %v537 = vsel %vm529, %v517, 0.0
      %v538 = vadd.f32 %v536, %v537
      %v539 = vsel %vm529, %v518, 0.0
      %v540 = vadd.f32 %v538, %v539
      %v541 = vsel %vm529, %v519, 0.0
      %v542 = vadd.f32 %v540, %v541
      %v543 = vsel %vm529, %v520, 0.0
      %v544 = vadd.f32 %v542, %v543
      %v545 = vsel %vm529, %v521, 0.0
      %v546 = vadd.f32 %v544, %v545
      %v547 = vsel %vm529, %v522, 0.0
      %v548 = vadd.f32 %v546, %v547
      %v549 = vsel %vm529, %v523, 0.0
      %v550 = vadd.f32 %v548, %v549
      %v551 = vsel %vm529, %v524, 0.0
      %v552 = vadd.f32 %v550, %v551
      %v553 = vsel %vm529, %v525, 0.0
      %v554 = vadd.f32 %v552, %v553
      %v555 = vsel %vm529, %v526, 0.0
      %v556 = vadd.f32 %v554, %v555
      %v557 = vsel %vm529, %v527, 0.0
      %v558 = vadd.f32 %v556, %v557
      %v559 = vsel %vm529, %v528, 0.0
      %v560 = vadd.f32 %v558, %v559
      %v561 = vrot.slane %v560, 4
      %v562 = vadd.f32 %v560, %v561
      %v563 = vrot.slane %v562, 2
      %v564 = vadd.f32 %v562, %v563
      %v565 = vrot.slane %v564, 1
      %v566 = vadd.f32 %v564, %v565
      %v567 = vadd.f32 %v566, %v480
      %v568 = vlaneseq
      %v569 = vshrl.u32 %v568, 7
      %v570 = vsub.s32 0, %v569
      %v571 = vrot.slane %v567, %v570
      %v572 = vmul.f32 %v481, %v571
      %v573 = vmul.f32 %v482, %v571
      %v574 = vmul.f32 %v483, %v571
      %v575 = vmul.f32 %v484, %v571
      %v576 = vmul.f32 %v485, %v571
      %v577 = vmul.f32 %v486, %v571
      %v578 = vmul.f32 %v487, %v571
      %v579 = vmul.f32 %v488, %v571
      %v580 = vmul.f32 %v489, %v571
      %v581 = vmul.f32 %v490, %v571
      %v582 = vmul.f32 %v491, %v571
      %v583 = vmul.f32 %v492, %v571
      %v584 = vmul.f32 %v493, %v571
      %v585 = vmul.f32 %v494, %v571
      %v586 = vmul.f32 %v495, %v571
      %v587 = vmul.f32 %v496, %v571
      %v588 = vsel %vm529, %v572, 0.0
      %589 = vadd.xlane.f32.xlu0 %v588
      %v590 = vpop.xlane.xlu0 %589
      %v591 = vsel %vm529, %v573, 0.0
      %592 = vadd.xlane.f32.xlu0 %v591
      %v593 = vpop.xlane.xlu0 %592
      %v594 = vsel %vm529, %v574, 0.0
      %595 = vadd.xlane.f32.xlu0 %v594
      %v596 = vpop.xlane.xlu0 %595
      %v597 = vsel %vm529, %v575, 0.0
      %598 = vadd.xlane.f32.xlu0 %v597
      %v599 = vpop.xlane.xlu0 %598
      %v600 = vsel %vm529, %v576, 0.0
      %601 = vadd.xlane.f32.xlu0 %v600
      %v602 = vpop.xlane.xlu0 %601
      %v603 = vsel %vm529, %v577, 0.0
      %604 = vadd.xlane.f32.xlu0 %v603
      %v605 = vpop.xlane.xlu0 %604
      %v606 = vsel %vm529, %v578, 0.0
      %607 = vadd.xlane.f32.xlu0 %v606
      %v608 = vpop.xlane.xlu0 %607
      %v609 = vsel %vm529, %v579, 0.0
      %610 = vadd.xlane.f32.xlu0 %v609
      %v611 = vpop.xlane.xlu0 %610
      %v612 = vsel %vm529, %v580, 0.0
      %613 = vadd.xlane.f32.xlu0 %v612
      %v614 = vpop.xlane.xlu0 %613
      %v615 = vsel %vm529, %v581, 0.0
      %616 = vadd.xlane.f32.xlu0 %v615
      %v617 = vpop.xlane.xlu0 %616
      %v618 = vsel %vm529, %v582, 0.0
      %619 = vadd.xlane.f32.xlu0 %v618
      %v620 = vpop.xlane.xlu0 %619
      %v621 = vsel %vm529, %v583, 0.0
      %622 = vadd.xlane.f32.xlu0 %v621
      %v623 = vpop.xlane.xlu0 %622
      %v624 = vsel %vm529, %v584, 0.0
      %625 = vadd.xlane.f32.xlu0 %v624
      %v626 = vpop.xlane.xlu0 %625
      %v627 = vsel %vm529, %v585, 0.0
      %628 = vadd.xlane.f32.xlu0 %v627
      %v629 = vpop.xlane.xlu0 %628
      %v630 = vsel %vm529, %v586, 0.0
      %631 = vadd.xlane.f32.xlu0 %v630
      %v632 = vpop.xlane.xlu0 %631
      %v633 = vsel %vm529, %v587, 0.0
      %634 = vadd.xlane.f32.xlu0 %v633
      %v635 = vpop.xlane.xlu0 %634
      %v636 = vadd.f32 %v590, %v497
      %v637 = vadd.f32 %v593, %v498
      %v638 = vadd.f32 %v596, %v499
      %v639 = vadd.f32 %v599, %v500
      %v640 = vadd.f32 %v602, %v501
      %v641 = vadd.f32 %v605, %v502
      %v642 = vadd.f32 %v608, %v503
      %v643 = vadd.f32 %v611, %v504
      %v644 = vadd.f32 %v614, %v505
      %v645 = vadd.f32 %v617, %v506
      %v646 = vadd.f32 %v620, %v507
      %v647 = vadd.f32 %v623, %v508
      %v648 = vadd.f32 %v626, %v509
      %v649 = vadd.f32 %v629, %v510
      %v650 = vadd.f32 %v632, %v511
      %v651 = vadd.f32 %v635, %v512
      %653 = vrot.lane.b32.xlu0 %v571, 32
      %v654 = vpop.permute.xlu0 %653
      %v656 = vmul.f32 %v481, %v654
      %v657 = vmul.f32 %v482, %v654
      %v658 = vmul.f32 %v483, %v654
      %v659 = vmul.f32 %v484, %v654
      %v660 = vmul.f32 %v485, %v654
      %v661 = vmul.f32 %v486, %v654
      %v662 = vmul.f32 %v487, %v654
      %v663 = vmul.f32 %v488, %v654
      %v664 = vmul.f32 %v489, %v654
      %v665 = vmul.f32 %v490, %v654
      %v666 = vmul.f32 %v491, %v654
      %v667 = vmul.f32 %v492, %v654
      %v668 = vmul.f32 %v493, %v654
      %v669 = vmul.f32 %v494, %v654
      %v670 = vmul.f32 %v495, %v654
      %v671 = vmul.f32 %v496, %v654
      %688 = vrot.lane.b32.xlu0 %v656, 96
      %v689 = vpop.permute.xlu0 %688
      %690 = vrot.lane.b32.xlu0 %v657, 96
      %v691 = vpop.permute.xlu0 %690
      %692 = vrot.lane.b32.xlu0 %v658, 96
      %v693 = vpop.permute.xlu0 %692
      %694 = vrot.lane.b32.xlu0 %v659, 96
      %v695 = vpop.permute.xlu0 %694
      %696 = vrot.lane.b32.xlu0 %v660, 96
      %v697 = vpop.permute.xlu0 %696
      %698 = vrot.lane.b32.xlu0 %v661, 96
      %v699 = vpop.permute.xlu0 %698
      %700 = vrot.lane.b32.xlu0 %v662, 96
      %v701 = vpop.permute.xlu0 %700
      %702 = vrot.lane.b32.xlu0 %v663, 96
      %v703 = vpop.permute.xlu0 %702
      %704 = vrot.lane.b32.xlu0 %v664, 96
      %v705 = vpop.permute.xlu0 %704
      %706 = vrot.lane.b32.xlu0 %v665, 96
      %v707 = vpop.permute.xlu0 %706
      %708 = vrot.lane.b32.xlu0 %v666, 96
      %v709 = vpop.permute.xlu0 %708
      %710 = vrot.lane.b32.xlu0 %v667, 96
      %v711 = vpop.permute.xlu0 %710
      %712 = vrot.lane.b32.xlu0 %v668, 96
      %v713 = vpop.permute.xlu0 %712
      %714 = vrot.lane.b32.xlu0 %v669, 96
      %v715 = vpop.permute.xlu0 %714
      %716 = vrot.lane.b32.xlu0 %v670, 96
      %v717 = vpop.permute.xlu0 %716
      %718 = vrot.lane.b32.xlu0 %v671, 96
      %v719 = vpop.permute.xlu0 %718
      %v736 = vsel %vm529, %v689, 0.0
      %737 = vadd.xlane.f32.xlu0 %v736
      %v738 = vpop.xlane.xlu0 %737
      %v739 = vsel %vm529, %v691, 0.0
      %740 = vadd.xlane.f32.xlu0 %v739
      %v741 = vpop.xlane.xlu0 %740
      %v742 = vsel %vm529, %v693, 0.0
      %743 = vadd.xlane.f32.xlu0 %v742
      %v744 = vpop.xlane.xlu0 %743
      %v745 = vsel %vm529, %v695, 0.0
      %746 = vadd.xlane.f32.xlu0 %v745
      %v747 = vpop.xlane.xlu0 %746
      %v748 = vsel %vm529, %v697, 0.0
      %749 = vadd.xlane.f32.xlu0 %v748
      %v750 = vpop.xlane.xlu0 %749
      %v751 = vsel %vm529, %v699, 0.0
      %752 = vadd.xlane.f32.xlu0 %v751
      %v753 = vpop.xlane.xlu0 %752
      %v754 = vsel %vm529, %v701, 0.0
      %755 = vadd.xlane.f32.xlu0 %v754
      %v756 = vpop.xlane.xlu0 %755
      %v757 = vsel %vm529, %v703, 0.0
      %758 = vadd.xlane.f32.xlu0 %v757
      %v759 = vpop.xlane.xlu0 %758
      %v760 = vsel %vm529, %v705, 0.0
      %761 = vadd.xlane.f32.xlu0 %v760
      %v762 = vpop.xlane.xlu0 %761
      %v763 = vsel %vm529, %v707, 0.0
      %764 = vadd.xlane.f32.xlu0 %v763
      %v765 = vpop.xlane.xlu0 %764
      %v766 = vsel %vm529, %v709, 0.0
      %767 = vadd.xlane.f32.xlu0 %v766
      %v768 = vpop.xlane.xlu0 %767
      %v769 = vsel %vm529, %v711, 0.0
      %770 = vadd.xlane.f32.xlu0 %v769
      %v771 = vpop.xlane.xlu0 %770
      %v772 = vsel %vm529, %v713, 0.0
      %773 = vadd.xlane.f32.xlu0 %v772
      %v774 = vpop.xlane.xlu0 %773
      %v775 = vsel %vm529, %v715, 0.0
      %776 = vadd.xlane.f32.xlu0 %v775
      %v777 = vpop.xlane.xlu0 %776
      %v778 = vsel %vm529, %v717, 0.0
      %779 = vadd.xlane.f32.xlu0 %v778
      %v780 = vpop.xlane.xlu0 %779
      %v781 = vsel %vm529, %v719, 0.0
      %782 = vadd.xlane.f32.xlu0 %v781
      %v783 = vpop.xlane.xlu0 %782
      %v784 = vadd.f32 %v738, %v497
      %v785 = vadd.f32 %v741, %v498
      %v786 = vadd.f32 %v744, %v499
      %v787 = vadd.f32 %v747, %v500
      %v788 = vadd.f32 %v750, %v501
      %v789 = vadd.f32 %v753, %v502
      %v790 = vadd.f32 %v756, %v503
      %v791 = vadd.f32 %v759, %v504
      %v792 = vadd.f32 %v762, %v505
      %v793 = vadd.f32 %v765, %v506
      %v794 = vadd.f32 %v768, %v507
      %v795 = vadd.f32 %v771, %v508
      %v796 = vadd.f32 %v774, %v509
      %v797 = vadd.f32 %v777, %v510
      %v798 = vadd.f32 %v780, %v511
      %v799 = vadd.f32 %v783, %v512
      %816 = vrot.lane.b32.xlu0 %v784, 127
      %v817 = vpop.permute.xlu0 %816
      %818 = vrot.lane.b32.xlu0 %v785, 127
      %v819 = vpop.permute.xlu0 %818
      %820 = vrot.lane.b32.xlu0 %v786, 127
      %v821 = vpop.permute.xlu0 %820
      %822 = vrot.lane.b32.xlu0 %v787, 127
      %v823 = vpop.permute.xlu0 %822
      %824 = vrot.lane.b32.xlu0 %v788, 127
      %v825 = vpop.permute.xlu0 %824
      %826 = vrot.lane.b32.xlu0 %v789, 127
      %v827 = vpop.permute.xlu0 %826
      %828 = vrot.lane.b32.xlu0 %v790, 127
      %v829 = vpop.permute.xlu0 %828
      %830 = vrot.lane.b32.xlu0 %v791, 127
      %v831 = vpop.permute.xlu0 %830
      %832 = vrot.lane.b32.xlu0 %v792, 127
      %v833 = vpop.permute.xlu0 %832
      %834 = vrot.lane.b32.xlu0 %v793, 127
      %v835 = vpop.permute.xlu0 %834
      %836 = vrot.lane.b32.xlu0 %v794, 127
      %v837 = vpop.permute.xlu0 %836
      %838 = vrot.lane.b32.xlu0 %v795, 127
      %v839 = vpop.permute.xlu0 %838
      %840 = vrot.lane.b32.xlu0 %v796, 127
      %v841 = vpop.permute.xlu0 %840
      %842 = vrot.lane.b32.xlu0 %v797, 127
      %v843 = vpop.permute.xlu0 %842
      %844 = vrot.lane.b32.xlu0 %v798, 127
      %v845 = vpop.permute.xlu0 %844
      %846 = vrot.lane.b32.xlu0 %v799, 127
      %v847 = vpop.permute.xlu0 %846
      %v864 = vmax.f32 %v636, %v817
      %v865 = vmax.f32 %v637, %v819
      %v866 = vmax.f32 %v638, %v821
      %v867 = vmax.f32 %v639, %v823
      %v868 = vmax.f32 %v640, %v825
      %v869 = vmax.f32 %v641, %v827
      %v870 = vmax.f32 %v642, %v829
      %v871 = vmax.f32 %v643, %v831
      %v872 = vmax.f32 %v644, %v833
      %v873 = vmax.f32 %v645, %v835
      %v874 = vmax.f32 %v646, %v837
      %v875 = vmax.f32 %v647, %v839
      %v876 = vmax.f32 %v648, %v841
      %v877 = vmax.f32 %v649, %v843
      %v878 = vmax.f32 %v650, %v845
      %v879 = vmax.f32 %v651, %v847
      %v880 = vsub.f32 %v636, %v864
      %v881 = vsub.f32 %v637, %v865
      %v882 = vsub.f32 %v638, %v866
      %v883 = vsub.f32 %v639, %v867
      %v884 = vsub.f32 %v640, %v868
      %v885 = vsub.f32 %v641, %v869
      %v886 = vsub.f32 %v642, %v870
      %v887 = vsub.f32 %v643, %v871
      %v888 = vsub.f32 %v644, %v872
      %v889 = vsub.f32 %v645, %v873
      %v890 = vsub.f32 %v646, %v874
      %v891 = vsub.f32 %v647, %v875
      %v892 = vsub.f32 %v648, %v876
      %v893 = vsub.f32 %v649, %v877
      %v894 = vsub.f32 %v650, %v878
      %v895 = vsub.f32 %v651, %v879
      %v896 = vmul.f32 %v880, 1.442695
      %v897 = vpow.pop %v896
      %v898 = vmul.f32 %v881, 1.442695
      %v899 = vpow.pop %v898
      %v900 = vmul.f32 %v882, 1.442695
      %v901 = vpow.pop %v900
      %v902 = vmul.f32 %v883, 1.442695
      %v903 = vpow.pop %v902
      %v904 = vmul.f32 %v884, 1.442695
      %v905 = vpow.pop %v904
      %v906 = vmul.f32 %v885, 1.442695
      %v907 = vpow.pop %v906
      %v908 = vmul.f32 %v886, 1.442695
      %v909 = vpow.pop %v908
      %v910 = vmul.f32 %v887, 1.442695
      %v911 = vpow.pop %v910
      %v912 = vmul.f32 %v888, 1.442695
      %v913 = vpow.pop %v912
      %v914 = vmul.f32 %v889, 1.442695
      %v915 = vpow.pop %v914
      %v916 = vmul.f32 %v890, 1.442695
      %v917 = vpow.pop %v916
      %v918 = vmul.f32 %v891, 1.442695
      %v919 = vpow.pop %v918
      %v920 = vmul.f32 %v892, 1.442695
      %v921 = vpow.pop %v920
      %v922 = vmul.f32 %v893, 1.442695
      %v923 = vpow.pop %v922
      %v924 = vmul.f32 %v894, 1.442695
      %v925 = vpow.pop %v924
      %v926 = vmul.f32 %v895, 1.442695
      %v927 = vpow.pop %v926
      %944 = vrot.lane.b32.xlu0 %v864, 1
      %v945 = vpop.permute.xlu0 %944
      %946 = vrot.lane.b32.xlu0 %v865, 1
      %v947 = vpop.permute.xlu0 %946
      %948 = vrot.lane.b32.xlu0 %v866, 1
      %v949 = vpop.permute.xlu0 %948
      %950 = vrot.lane.b32.xlu0 %v867, 1
      %v951 = vpop.permute.xlu0 %950
      %952 = vrot.lane.b32.xlu0 %v868, 1
      %v953 = vpop.permute.xlu0 %952
      %954 = vrot.lane.b32.xlu0 %v869, 1
      %v955 = vpop.permute.xlu0 %954
      %956 = vrot.lane.b32.xlu0 %v870, 1
      %v957 = vpop.permute.xlu0 %956
      %958 = vrot.lane.b32.xlu0 %v871, 1
      %v959 = vpop.permute.xlu0 %958
      %960 = vrot.lane.b32.xlu0 %v872, 1
      %v961 = vpop.permute.xlu0 %960
      %962 = vrot.lane.b32.xlu0 %v873, 1
      %v963 = vpop.permute.xlu0 %962
      %964 = vrot.lane.b32.xlu0 %v874, 1
      %v965 = vpop.permute.xlu0 %964
      %966 = vrot.lane.b32.xlu0 %v875, 1
      %v967 = vpop.permute.xlu0 %966
      %968 = vrot.lane.b32.xlu0 %v876, 1
      %v969 = vpop.permute.xlu0 %968
      %970 = vrot.lane.b32.xlu0 %v877, 1
      %v971 = vpop.permute.xlu0 %970
      %972 = vrot.lane.b32.xlu0 %v878, 1
      %v973 = vpop.permute.xlu0 %972
      %974 = vrot.lane.b32.xlu0 %v879, 1
      %v975 = vpop.permute.xlu0 %974
      %v992 = vsub.f32 %v784, %v945
      %v993 = vsub.f32 %v785, %v947
      %v994 = vsub.f32 %v786, %v949
      %v995 = vsub.f32 %v787, %v951
      %v996 = vsub.f32 %v788, %v953
      %v997 = vsub.f32 %v789, %v955
      %v998 = vsub.f32 %v790, %v957
      %v999 = vsub.f32 %v791, %v959
      %v1000 = vsub.f32 %v792, %v961
      %v1001 = vsub.f32 %v793, %v963
      %v1002 = vsub.f32 %v794, %v965
      %v1003 = vsub.f32 %v795, %v967
      %v1004 = vsub.f32 %v796, %v969
      %v1005 = vsub.f32 %v797, %v971
      %v1006 = vsub.f32 %v798, %v973
      %v1007 = vsub.f32 %v799, %v975
      %v1008 = vmul.f32 %v992, 1.442695
      %v1009 = vpow.pop %v1008
      %v1010 = vmul.f32 %v993, 1.442695
      %v1011 = vpow.pop %v1010
      %v1012 = vmul.f32 %v994, 1.442695
      %v1013 = vpow.pop %v1012
      %v1014 = vmul.f32 %v995, 1.442695
      %v1015 = vpow.pop %v1014
      %v1016 = vmul.f32 %v996, 1.442695
      %v1017 = vpow.pop %v1016
      %v1018 = vmul.f32 %v997, 1.442695
      %v1019 = vpow.pop %v1018
      %v1020 = vmul.f32 %v998, 1.442695
      %v1021 = vpow.pop %v1020
      %v1022 = vmul.f32 %v999, 1.442695
      %v1023 = vpow.pop %v1022
      %v1024 = vmul.f32 %v1000, 1.442695
      %v1025 = vpow.pop %v1024
      %v1026 = vmul.f32 %v1001, 1.442695
      %v1027 = vpow.pop %v1026
      %v1028 = vmul.f32 %v1002, 1.442695
      %v1029 = vpow.pop %v1028
      %v1030 = vmul.f32 %v1003, 1.442695
      %v1031 = vpow.pop %v1030
      %v1032 = vmul.f32 %v1004, 1.442695
      %v1033 = vpow.pop %v1032
      %v1034 = vmul.f32 %v1005, 1.442695
      %v1035 = vpow.pop %v1034
      %v1036 = vmul.f32 %v1006, 1.442695
      %v1037 = vpow.pop %v1036
      %v1038 = vmul.f32 %v1007, 1.442695
      %v1039 = vpow.pop %v1038
      %1056 = vrot.lane.b32.xlu0 %v1009, 127
      %v1057 = vpop.permute.xlu0 %1056
      %1058 = vrot.lane.b32.xlu0 %v1011, 127
      %v1059 = vpop.permute.xlu0 %1058
      %1060 = vrot.lane.b32.xlu0 %v1013, 127
      %v1061 = vpop.permute.xlu0 %1060
      %1062 = vrot.lane.b32.xlu0 %v1015, 127
      %v1063 = vpop.permute.xlu0 %1062
      %1064 = vrot.lane.b32.xlu0 %v1017, 127
      %v1065 = vpop.permute.xlu0 %1064
      %1066 = vrot.lane.b32.xlu0 %v1019, 127
      %v1067 = vpop.permute.xlu0 %1066
      %1068 = vrot.lane.b32.xlu0 %v1021, 127
      %v1069 = vpop.permute.xlu0 %1068
      %1070 = vrot.lane.b32.xlu0 %v1023, 127
      %v1071 = vpop.permute.xlu0 %1070
      %1072 = vrot.lane.b32.xlu0 %v1025, 127
      %v1073 = vpop.permute.xlu0 %1072
      %1074 = vrot.lane.b32.xlu0 %v1027, 127
      %v1075 = vpop.permute.xlu0 %1074
      %1076 = vrot.lane.b32.xlu0 %v1029, 127
      %v1077 = vpop.permute.xlu0 %1076
      %1078 = vrot.lane.b32.xlu0 %v1031, 127
      %v1079 = vpop.permute.xlu0 %1078
      %1080 = vrot.lane.b32.xlu0 %v1033, 127
      %v1081 = vpop.permute.xlu0 %1080
      %1082 = vrot.lane.b32.xlu0 %v1035, 127
      %v1083 = vpop.permute.xlu0 %1082
      %1084 = vrot.lane.b32.xlu0 %v1037, 127
      %v1085 = vpop.permute.xlu0 %1084
      %1086 = vrot.lane.b32.xlu0 %v1039, 127
      %v1087 = vpop.permute.xlu0 %1086
      %v1104 = vadd.f32 %v897, %v1057
      %v1105 = vadd.f32 %v899, %v1059
      %v1106 = vadd.f32 %v901, %v1061
      %v1107 = vadd.f32 %v903, %v1063
      %v1108 = vadd.f32 %v905, %v1065
      %v1109 = vadd.f32 %v907, %v1067
      %v1110 = vadd.f32 %v909, %v1069
      %v1111 = vadd.f32 %v911, %v1071
      %v1112 = vadd.f32 %v913, %v1073
      %v1113 = vadd.f32 %v915, %v1075
      %v1114 = vadd.f32 %v917, %v1077
      %v1115 = vadd.f32 %v919, %v1079
      %v1116 = vadd.f32 %v921, %v1081
      %v1117 = vadd.f32 %v923, %v1083
      %v1118 = vadd.f32 %v925, %v1085
      %v1119 = vadd.f32 %v927, %v1087
      %v1120 = vrcp.pop %v1104
      %v1121 = vmul.f32 1.0, %v1120
      %v1122 = vrcp.pop %v1105
      %v1123 = vmul.f32 1.0, %v1122
      %v1124 = vrcp.pop %v1106
      %v1125 = vmul.f32 1.0, %v1124
      %v1126 = vrcp.pop %v1107
      %v1127 = vmul.f32 1.0, %v1126
      %v1128 = vrcp.pop %v1108
      %v1129 = vmul.f32 1.0, %v1128
      %v1130 = vrcp.pop %v1109
      %v1131 = vmul.f32 1.0, %v1130
      %v1132 = vrcp.pop %v1110
      %v1133 = vmul.f32 1.0, %v1132
      %v1134 = vrcp.pop %v1111
      %v1135 = vmul.f32 1.0, %v1134
      %v1136 = vrcp.pop %v1112
      %v1137 = vmul.f32 1.0, %v1136
      %v1138 = vrcp.pop %v1113
      %v1139 = vmul.f32 1.0, %v1138
      %v1140 = vrcp.pop %v1114
      %v1141 = vmul.f32 1.0, %v1140
      %v1142 = vrcp.pop %v1115
      %v1143 = vmul.f32 1.0, %v1142
      %v1144 = vrcp.pop %v1116
      %v1145 = vmul.f32 1.0, %v1144
      %v1146 = vrcp.pop %v1117
      %v1147 = vmul.f32 1.0, %v1146
      %v1148 = vrcp.pop %v1118
      %v1149 = vmul.f32 1.0, %v1148
      %v1150 = vrcp.pop %v1119
      %v1151 = vmul.f32 1.0, %v1150
      %v1152 = vmul.f32 %v897, %v1121
      %v1153 = vmul.f32 %v899, %v1123
      %v1154 = vmul.f32 %v901, %v1125
      %v1155 = vmul.f32 %v903, %v1127
      %v1156 = vmul.f32 %v905, %v1129
      %v1157 = vmul.f32 %v907, %v1131
      %v1158 = vmul.f32 %v909, %v1133
      %v1159 = vmul.f32 %v911, %v1135
      %v1160 = vmul.f32 %v913, %v1137
      %v1161 = vmul.f32 %v915, %v1139
      %v1162 = vmul.f32 %v917, %v1141
      %v1163 = vmul.f32 %v919, %v1143
      %v1164 = vmul.f32 %v921, %v1145
      %v1165 = vmul.f32 %v923, %v1147
      %v1166 = vmul.f32 %v925, %v1149
      %v1167 = vmul.f32 %v927, %v1151
      %1184 = vrot.lane.b32.xlu0 %v1121, 1
      %v1185 = vpop.permute.xlu0 %1184
      %1186 = vrot.lane.b32.xlu0 %v1123, 1
      %v1187 = vpop.permute.xlu0 %1186
      %1188 = vrot.lane.b32.xlu0 %v1125, 1
      %v1189 = vpop.permute.xlu0 %1188
      %1190 = vrot.lane.b32.xlu0 %v1127, 1
      %v1191 = vpop.permute.xlu0 %1190
      %1192 = vrot.lane.b32.xlu0 %v1129, 1
      %v1193 = vpop.permute.xlu0 %1192
      %1194 = vrot.lane.b32.xlu0 %v1131, 1
      %v1195 = vpop.permute.xlu0 %1194
      %1196 = vrot.lane.b32.xlu0 %v1133, 1
      %v1197 = vpop.permute.xlu0 %1196
      %1198 = vrot.lane.b32.xlu0 %v1135, 1
      %v1199 = vpop.permute.xlu0 %1198
      %1200 = vrot.lane.b32.xlu0 %v1137, 1
      %v1201 = vpop.permute.xlu0 %1200
      %1202 = vrot.lane.b32.xlu0 %v1139, 1
      %v1203 = vpop.permute.xlu0 %1202
      %1204 = vrot.lane.b32.xlu0 %v1141, 1
      %v1205 = vpop.permute.xlu0 %1204
      %1206 = vrot.lane.b32.xlu0 %v1143, 1
      %v1207 = vpop.permute.xlu0 %1206
      %1208 = vrot.lane.b32.xlu0 %v1145, 1
      %v1209 = vpop.permute.xlu0 %1208
      %1210 = vrot.lane.b32.xlu0 %v1147, 1
      %v1211 = vpop.permute.xlu0 %1210
      %1212 = vrot.lane.b32.xlu0 %v1149, 1
      %v1213 = vpop.permute.xlu0 %1212
      %1214 = vrot.lane.b32.xlu0 %v1151, 1
      %v1215 = vpop.permute.xlu0 %1214
      %v1232 = vmul.f32 %v1009, %v1185
      %v1233 = vmul.f32 %v1011, %v1187
      %v1234 = vmul.f32 %v1013, %v1189
      %v1235 = vmul.f32 %v1015, %v1191
      %v1236 = vmul.f32 %v1017, %v1193
      %v1237 = vmul.f32 %v1019, %v1195
      %v1238 = vmul.f32 %v1021, %v1197
      %v1239 = vmul.f32 %v1023, %v1199
      %v1240 = vmul.f32 %v1025, %v1201
      %v1241 = vmul.f32 %v1027, %v1203
      %v1242 = vmul.f32 %v1029, %v1205
      %v1243 = vmul.f32 %v1031, %v1207
      %v1244 = vmul.f32 %v1033, %v1209
      %v1245 = vmul.f32 %v1035, %v1211
      %v1246 = vmul.f32 %v1037, %v1213
      %v1247 = vmul.f32 %v1039, %v1215
      %1249 = vset.pattern.permute.xlu0 0
      %1250 = vperm.xlu0 %1249, %v1152
      %v1251 = vpop.permute.xlu0 %1250
      %1254 = vset.pattern.permute.xlu0 0
      %1255 = vperm.xlu0 %1254, %v1153
      %v1256 = vpop.permute.xlu0 %1255
      %1259 = vset.pattern.permute.xlu0 0
      %1260 = vperm.xlu0 %1259, %v1154
      %v1261 = vpop.permute.xlu0 %1260
      %1264 = vset.pattern.permute.xlu0 0
      %1265 = vperm.xlu0 %1264, %v1155
      %v1266 = vpop.permute.xlu0 %1265
      %1269 = vset.pattern.permute.xlu0 0
      %1270 = vperm.xlu0 %1269, %v1156
      %v1271 = vpop.permute.xlu0 %1270
      %1274 = vset.pattern.permute.xlu0 0
      %1275 = vperm.xlu0 %1274, %v1157
      %v1276 = vpop.permute.xlu0 %1275
      %1279 = vset.pattern.permute.xlu0 0
      %1280 = vperm.xlu0 %1279, %v1158
      %v1281 = vpop.permute.xlu0 %1280
      %1284 = vset.pattern.permute.xlu0 0
      %1285 = vperm.xlu0 %1284, %v1159
      %v1286 = vpop.permute.xlu0 %1285
      %1289 = vset.pattern.permute.xlu0 0
      %1290 = vperm.xlu0 %1289, %v1160
      %v1291 = vpop.permute.xlu0 %1290
      %1294 = vset.pattern.permute.xlu0 0
      %1295 = vperm.xlu0 %1294, %v1161
      %v1296 = vpop.permute.xlu0 %1295
      %1299 = vset.pattern.permute.xlu0 0
      %1300 = vperm.xlu0 %1299, %v1162
      %v1301 = vpop.permute.xlu0 %1300
      %1304 = vset.pattern.permute.xlu0 0
      %1305 = vperm.xlu0 %1304, %v1163
      %v1306 = vpop.permute.xlu0 %1305
      %1309 = vset.pattern.permute.xlu0 0
      %1310 = vperm.xlu0 %1309, %v1164
      %v1311 = vpop.permute.xlu0 %1310
      %1314 = vset.pattern.permute.xlu0 0
      %1315 = vperm.xlu0 %1314, %v1165
      %v1316 = vpop.permute.xlu0 %1315
      %1319 = vset.pattern.permute.xlu0 0
      %1320 = vperm.xlu0 %1319, %v1166
      %v1321 = vpop.permute.xlu0 %1320
      %1324 = vset.pattern.permute.xlu0 0
      %1325 = vperm.xlu0 %1324, %v1167
      %v1326 = vpop.permute.xlu0 %1325
      %v1328 = vmul.f32 %v1251, %v272
      %v1329 = vmul.f32 %v1251, %v273
      %v1330 = vmul.f32 %v1256, %v274
      %v1331 = vmul.f32 %v1256, %v275
      %v1332 = vmul.f32 %v1261, %v276
      %v1333 = vmul.f32 %v1261, %v277
      %v1334 = vmul.f32 %v1266, %v278
      %v1335 = vmul.f32 %v1266, %v279
      %v1336 = vmul.f32 %v1271, %v280
      %v1337 = vmul.f32 %v1271, %v281
      %v1338 = vmul.f32 %v1276, %v282
      %v1339 = vmul.f32 %v1276, %v283
      %v1340 = vmul.f32 %v1281, %v284
      %v1341 = vmul.f32 %v1281, %v285
      %v1342 = vmul.f32 %v1286, %v286
      %v1343 = vmul.f32 %v1286, %v287
      %v1344 = vmul.f32 %v1291, %v288
      %v1345 = vmul.f32 %v1291, %v289
      %v1346 = vmul.f32 %v1296, %v290
      %v1347 = vmul.f32 %v1296, %v291
      %v1348 = vmul.f32 %v1301, %v292
      %v1349 = vmul.f32 %v1301, %v293
      %v1350 = vmul.f32 %v1306, %v294
      %v1351 = vmul.f32 %v1306, %v295
      %v1352 = vmul.f32 %v1311, %v296
      %v1353 = vmul.f32 %v1311, %v297
      %v1354 = vmul.f32 %v1316, %v298
      %v1355 = vmul.f32 %v1316, %v299
      %v1356 = vmul.f32 %v1321, %v300
      %v1357 = vmul.f32 %v1321, %v301
      %v1358 = vmul.f32 %v1326, %v302
      %v1359 = vmul.f32 %v1326, %v303
      %1361 = vset.pattern.permute.xlu0 1
      %1362 = vperm.xlu0 %1361, %v1232
      %v1363 = vpop.permute.xlu0 %1362
      %1366 = vset.pattern.permute.xlu0 1
      %1367 = vperm.xlu0 %1366, %v1233
      %v1368 = vpop.permute.xlu0 %1367
      %1371 = vset.pattern.permute.xlu0 1
      %1372 = vperm.xlu0 %1371, %v1234
      %v1373 = vpop.permute.xlu0 %1372
      %1376 = vset.pattern.permute.xlu0 1
      %1377 = vperm.xlu0 %1376, %v1235
      %v1378 = vpop.permute.xlu0 %1377
      %1381 = vset.pattern.permute.xlu0 1
      %1382 = vperm.xlu0 %1381, %v1236
      %v1383 = vpop.permute.xlu0 %1382
      %1386 = vset.pattern.permute.xlu0 1
      %1387 = vperm.xlu0 %1386, %v1237
      %v1388 = vpop.permute.xlu0 %1387
      %1391 = vset.pattern.permute.xlu0 1
      %1392 = vperm.xlu0 %1391, %v1238
      %v1393 = vpop.permute.xlu0 %1392
      %1396 = vset.pattern.permute.xlu0 1
      %1397 = vperm.xlu0 %1396, %v1239
      %v1398 = vpop.permute.xlu0 %1397
      %1401 = vset.pattern.permute.xlu0 1
      %1402 = vperm.xlu0 %1401, %v1240
      %v1403 = vpop.permute.xlu0 %1402
      %1406 = vset.pattern.permute.xlu0 1
      %1407 = vperm.xlu0 %1406, %v1241
      %v1408 = vpop.permute.xlu0 %1407
      %1411 = vset.pattern.permute.xlu0 1
      %1412 = vperm.xlu0 %1411, %v1242
      %v1413 = vpop.permute.xlu0 %1412
      %1416 = vset.pattern.permute.xlu0 1
      %1417 = vperm.xlu0 %1416, %v1243
      %v1418 = vpop.permute.xlu0 %1417
      %1421 = vset.pattern.permute.xlu0 1
      %1422 = vperm.xlu0 %1421, %v1244
      %v1423 = vpop.permute.xlu0 %1422
      %1426 = vset.pattern.permute.xlu0 1
      %1427 = vperm.xlu0 %1426, %v1245
      %v1428 = vpop.permute.xlu0 %1427
      %1431 = vset.pattern.permute.xlu0 1
      %1432 = vperm.xlu0 %1431, %v1246
      %v1433 = vpop.permute.xlu0 %1432
      %1436 = vset.pattern.permute.xlu0 1
      %1437 = vperm.xlu0 %1436, %v1247
      %v1438 = vpop.permute.xlu0 %1437
      %v1440 = vmul.f32 %v1363, %v304
      %v1441 = vmul.f32 %v1363, %v305
      %v1442 = vmul.f32 %v1368, %v306
      %v1443 = vmul.f32 %v1368, %v307
      %v1444 = vmul.f32 %v1373, %v308
      %v1445 = vmul.f32 %v1373, %v309
      %v1446 = vmul.f32 %v1378, %v310
      %v1447 = vmul.f32 %v1378, %v311
      %v1448 = vmul.f32 %v1383, %v312
      %v1449 = vmul.f32 %v1383, %v313
      %v1450 = vmul.f32 %v1388, %v314
      %v1451 = vmul.f32 %v1388, %v315
      %v1452 = vmul.f32 %v1393, %v316
      %v1453 = vmul.f32 %v1393, %v317
      %v1454 = vmul.f32 %v1398, %v318
      %v1455 = vmul.f32 %v1398, %v319
      %v1456 = vmul.f32 %v1403, %v320
      %v1457 = vmul.f32 %v1403, %v321
      %v1458 = vmul.f32 %v1408, %v322
      %v1459 = vmul.f32 %v1408, %v323
      %v1460 = vmul.f32 %v1413, %v324
      %v1461 = vmul.f32 %v1413, %v325
      %v1462 = vmul.f32 %v1418, %v326
      %v1463 = vmul.f32 %v1418, %v327
      %v1464 = vmul.f32 %v1423, %v328
      %v1465 = vmul.f32 %v1423, %v329
      %v1466 = vmul.f32 %v1428, %v330
      %v1467 = vmul.f32 %v1428, %v331
      %v1468 = vmul.f32 %v1433, %v332
      %v1469 = vmul.f32 %v1433, %v333
      %v1470 = vmul.f32 %v1438, %v334
      %v1471 = vmul.f32 %v1438, %v335
      %v1472 = vadd.f32 %v1328, %v1440
      %v1473 = vadd.f32 %v1329, %v1441
      %v1474 = vadd.f32 %v1330, %v1442
      %v1475 = vadd.f32 %v1331, %v1443
      %v1476 = vadd.f32 %v1332, %v1444
      %v1477 = vadd.f32 %v1333, %v1445
      %v1478 = vadd.f32 %v1334, %v1446
      %v1479 = vadd.f32 %v1335, %v1447
      %v1480 = vadd.f32 %v1336, %v1448
      %v1481 = vadd.f32 %v1337, %v1449
      %v1482 = vadd.f32 %v1338, %v1450
      %v1483 = vadd.f32 %v1339, %v1451
      %v1484 = vadd.f32 %v1340, %v1452
      %v1485 = vadd.f32 %v1341, %v1453
      %v1486 = vadd.f32 %v1342, %v1454
      %v1487 = vadd.f32 %v1343, %v1455
      %v1488 = vadd.f32 %v1344, %v1456
      %v1489 = vadd.f32 %v1345, %v1457
      %v1490 = vadd.f32 %v1346, %v1458
      %v1491 = vadd.f32 %v1347, %v1459
      %v1492 = vadd.f32 %v1348, %v1460
      %v1493 = vadd.f32 %v1349, %v1461
      %v1494 = vadd.f32 %v1350, %v1462
      %v1495 = vadd.f32 %v1351, %v1463
      %v1496 = vadd.f32 %v1352, %v1464
      %v1497 = vadd.f32 %v1353, %v1465
      %v1498 = vadd.f32 %v1354, %v1466
      %v1499 = vadd.f32 %v1355, %v1467
      %v1500 = vadd.f32 %v1356, %v1468
      %v1501 = vadd.f32 %v1357, %v1469
      %v1502 = vadd.f32 %v1358, %v1470
      %v1503 = vadd.f32 %v1359, %v1471
      %1504 = vst [vmem:[%s271] sm:$0xff] %v1472
      %1505 = vst [vmem:[%s271 + $0x8] sm:$0xff] %v1473
      %1506 = vst [vmem:[%s271 + $0x10] sm:$0xff] %v1474
      %1507 = vst [vmem:[%s271 + $0x18] sm:$0xff] %v1475
      %1508 = vst [vmem:[%s271 + $0x20] sm:$0xff] %v1476
      %1509 = vst [vmem:[%s271 + $0x28] sm:$0xff] %v1477
      %1510 = vst [vmem:[%s271 + $0x30] sm:$0xff] %v1478
      %1511 = vst [vmem:[%s271 + $0x38] sm:$0xff] %v1479
      %1512 = vst [vmem:[%s271 + $0x40] sm:$0xff] %v1480
      %1513 = vst [vmem:[%s271 + $0x48] sm:$0xff] %v1481
      %1514 = vst [vmem:[%s271 + $0x50] sm:$0xff] %v1482
      %1515 = vst [vmem:[%s271 + $0x58] sm:$0xff] %v1483
      %1516 = vst [vmem:[%s271 + $0x60] sm:$0xff] %v1484
      %1517 = vst [vmem:[%s271 + $0x68] sm:$0xff] %v1485
      %1518 = vst [vmem:[%s271 + $0x70] sm:$0xff] %v1486
      %1519 = vst [vmem:[%s271 + $0x78] sm:$0xff] %v1487
      %1520 = vst [vmem:[%s271 + $0x80] sm:$0xff] %v1488
      %1521 = vst [vmem:[%s271 + $0x88] sm:$0xff] %v1489
      %1522 = vst [vmem:[%s271 + $0x90] sm:$0xff] %v1490
      %1523 = vst [vmem:[%s271 + $0x98] sm:$0xff] %v1491
      %1524 = vst [vmem:[%s271 + $0xa0] sm:$0xff] %v1492
      %1525 = vst [vmem:[%s271 + $0xa8] sm:$0xff] %v1493
      %1526 = vst [vmem:[%s271 + $0xb0] sm:$0xff] %v1494
      %1527 = vst [vmem:[%s271 + $0xb8] sm:$0xff] %v1495
      %1528 = vst [vmem:[%s271 + $0xc0] sm:$0xff] %v1496
      %1529 = vst [vmem:[%s271 + $0xc8] sm:$0xff] %v1497
      %1530 = vst [vmem:[%s271 + $0xd0] sm:$0xff] %v1498
      %1531 = vst [vmem:[%s271 + $0xd8] sm:$0xff] %v1499
      %1532 = vst [vmem:[%s271 + $0xe0] sm:$0xff] %v1500
      %1533 = vst [vmem:[%s271 + $0xe8] sm:$0xff] %v1501
      %1534 = vst [vmem:[%s271 + $0xf0] sm:$0xff] %v1502
      %1535 = vst [vmem:[%s271 + $0xf8] sm:$0xff] %v1503
      %p1536 = scmp.lt.s32.totalorder %s17, 1
      %s1537 = scalar_select %p1536, %s17, 1
      %s1538 = smul.addr %s1537, 32
      %s1539 = smul.addr %s1538, 8
      %s1540 = scalar_lea.vmem %s6, %s1539
      // Predicated region
      $region45: #{sk_attention_forward.1} parent=43 // pred_check
        %p1541 = pneg %p171
      $region46: #{sk_attention_forward.1} parent=43 // pred_check_branch
        %1543 = sbr.rel (%p1541) target = $region48
      $region47: #{sk_attention_forward.1} parent=43 // pred_region
        _
      $region48: #{sk_attention_forward.1} parent=43 // pred_fallthru
        _
    $region44: #{sk_attention_forward.1} parent=5 // pred_fallthru
      _
    %p1544 = scmp.le.s32.totalorder 2, %s12
    // Predicated region
    $region49: #{sk_attention_forward.1} parent=5 // pred_check
      %p1545 = pneg %p1544
    $region50: #{sk_attention_forward.1} parent=5 // pred_check_branch
      %1547 = sbr.rel (%p1545) target = $region52
    $region51: #{sk_attention_forward.1} parent=5 // pred_region
      %s1548 = ssub.s32 %s12, 2
      // Predicated region
      $region53: #{sk_attention_forward.1} parent=51 // pred_check
        %p1549 = pneg %p177
      $region54: #{sk_attention_forward.1} parent=51 // pred_check_branch
        %1551 = sbr.rel (%p1549) target = $region56
      $region55: #{sk_attention_forward.1} parent=51 // pred_region
        %p1552 = scmp.lt.s32.totalorder %s18, 1
        %s1553 = scalar_select %p1552, %s18, 1
        %s1554 = smul.addr %s1553, 32
        %s1555 = smul.addr %s1554, 8
        %s1556 = scalar_lea.vmem %s6, %s1555
      $region56: #{sk_attention_forward.1} parent=51 // pred_fallthru
        _
    $region52: #{sk_attention_forward.1} parent=5 // pred_fallthru
      _
  $region6: #{sk_attention_forward.1} parent=0 // loop_footer
    %s16 = sadd.s32 1, %s12
  $region7: #{sk_attention_forward.1} parent=0 // loop_footer_branch
    %11 = sbr.rel target = $region3
  $region8: #{sk_attention_forward.1} parent=0 // loop_exit
    _

</llo_original>
